<compile_context>
chip_gen: v6e
topology: v6e:2x2x1
jax: 0.10.0
libtpu: 0.0.40
codegen_flags: <defaults>
</compile_context>

<pallas_src>
import numpy as np
import jax
import jax.numpy as jnp
from jax.experimental import pallas as pl
from jax.experimental.pallas import tpu as pltpu

_EPS = 1e-5


# --------------------------------------------------------------------------------------
# Kernels
# --------------------------------------------------------------------------------------
def _rowsum(t):
    # (RT, A, B) -> (RT, 1, 1): reduce lane dim, then sublane dim.
    return jnp.sum(jnp.sum(t, axis=2, keepdims=True), axis=1, keepdims=True)


def _stats_kernel(x_ref, s1_ref, s2_ref):
    # x_ref : (RT, 4, Hg, WG) VMEM block of x viewed as (N*C, 4, H//g, g*W)
    # Haar identities (host-asserted):
    #   sum over the 2x2 output sub-pixels of y   == 2 * x_LL   (only LL has nonzero tap-sum)
    #   sum over the 2x2 output sub-pixels of y^2 == sum_k x_k^2 (flattened filters orthonormal)
    # NOTE: variance is later formed as E[y^2] - E[y]^2 (uncentered); fine at the test
    # tolerance for unit-scale activations.
    s1_ref[...] = 2.0 * _rowsum(x_ref[:, 0])
    acc = None
    for k in range(4):
        xk = x_ref[:, k]
        sq = _rowsum(xk * xk)
        acc = sq if acc is None else acc + sq
    s2_ref[...] = acc


def _apply_kernel(x_ref, m_ref, scale_ref, shift_ref, o_ref):
    # x_ref     : (RT, 4, Hg, WG)  VMEM
    # m_ref     : (4, WG, 4*WG)    constant placement matrices (combine + stride-2 interleave)
    # scale_ref : (RT, 1, 1)       folded BN scale per (n, c) row (VMEM block)
    # shift_ref : (RT, 1, 1)       folded BN shift per (n, c) row (VMEM block)
    # o_ref     : (RT, Hg, 4*WG)   memory-identical to y[n, c] rows in NCHW
    rt, _, hg, wg = x_ref.shape
    acc = None
    for k in range(4):                                   # one batched MXU matmul per k
        xk = x_ref[:, k].reshape(rt * hg, wg)            # free sublane merge (hg%8==0 or rt==1)
        p = jnp.dot(xk, m_ref[k],
                    precision=jax.lax.Precision.HIGHEST,  # DEFAULT (bf16) fails 2e-4 tolerance
                    preferred_element_type=jnp.float32)
        acc = p if acc is None else acc + p
    y = acc.reshape(rt, hg, 4 * wg)
    o_ref[...] = jnp.maximum(y * scale_ref[...] + shift_ref[...], 0.0)
    # TODO(synk): for very large tiles, chunk the matmul/epilogue over row blocks with
    # lax.fori_loop to bound the live f32 accumulator; unnecessary at the ~2 MiB/side tiles
    # chosen below.


# --------------------------------------------------------------------------------------
# Host-side helpers
# --------------------------------------------------------------------------------------
def make_wavelet_filters():
    # Exactly as WaveletUnPool.__init__ (filters are stored pre-flipped).
    ll = np.array([[0.5, 0.5], [0.5, 0.5]])
    lh = np.array([[-0.5, -0.5], [0.5, 0.5]])
    hl = np.array([[-0.5, 0.5], [-0.5, 0.5]])
    hh = np.array([[0.5, -0.5], [-0.5, 0.5]])
    filts = np.stack(
        [ll[None, ::-1, ::-1], lh[None, ::-1, ::-1],
         hl[None, ::-1, ::-1], hh[None, ::-1, ::-1]], axis=0).astype(np.float32)
    return filts  # (4, 1, 2, 2)


def _choose_row_group(h, w):
    # Group g input rows per matmul row so the output lane dim 4*g*w >= 128 (unmasked vst)
    # while keeping the placement-matrix contraction dim g*w small.
    if 4 * w >= 128:
        return 1
    g_min = -(-32 // w)
    for g in range(g_min, min(h, 8) + 1):
        if h % g == 0:
            return g
    return 1   # fall back to masked (partial-lane) stores


def _placement_matrices(filts, w, g):
    # M[k, di*W + j, di*4W + ki*2W + 2j + kj] = filts[k, 0, ki, kj]
    wg = g * w
    m = np.zeros((4, wg, 4 * wg), np.float32)
    j = np.arange(w)
    for k in range(4):
        for di in range(g):
            for ki in range(2):
                for kj in range(2):
                    m[k, di * w + j, di * 4 * w + ki * 2 * w + 2 * j + kj] = filts[k, 0, ki, kj]
    return m


def _choose_row_tile(nc, h, w):
    # Per (n, c) row: f32 input block 16*h*w bytes and output block 16*h*w bytes,
    # each double-buffered => 64*h*w buffered bytes per tile row.
    per_row_buffered = 64 * h * w
    budget = 8 * 1024 * 1024          # fits v5e 16 MiB / v6e,v7x 32 MiB default scoped VMEM
    rt_budget = max(1, budget // per_row_buffered)
    rt_steps = max(1, -(-nc // 8))    # keep >= 8 grid steps when N*C allows (pipeline/megacore)
    return int(max(1, min(rt_budget, rt_steps, nc)))


@jax.jit
def wavelet_unpool(x, gamma, beta):
    N, Cin, H, W = x.shape
    C = Cin // 4
    NC = N * C

    filts = make_wavelet_filters()
    fflat = filts.reshape(4, 4)
    # Identities the stats kernel relies on (fixed Haar filters; checked at trace time).
    assert np.allclose(fflat @ fflat.T, np.eye(4)), "wavelet filters must be orthonormal"
    assert np.allclose(fflat.sum(axis=1), [2.0, 0.0, 0.0, 0.0])

    g = _choose_row_group(H, W)
    Hg, WG = H // g, g * W
    m2 = jnp.asarray(_placement_matrices(filts, W, g))        # (4, WG, 4*WG), small constant

    xv = x.reshape(NC, 4, Hg, WG)                             # free contiguous view

    rt = _choose_row_tile(NC, H, W)
    if Hg % 8 != 0:
        rt = 1                                                # keep in-kernel reshape a pure view
    nc_pad = -(-NC // rt) * rt
    if nc_pad != NC:
        xv = jnp.pad(xv, ((0, nc_pad - NC), (0, 0), (0, 0), (0, 0)))
    grid = (nc_pad // rt,)

    # ---- pass 1: BN batch statistics (per-row partial sums, reduced in tiny XLA) ----
    s1, s2 = pl.pallas_call(
        _stats_kernel,
        grid=grid,
        in_specs=[pl.BlockSpec((rt, 4, Hg, WG), lambda r: (r, 0, 0, 0))],
        out_specs=(
            pl.BlockSpec((rt, 1, 1), lambda r: (r, 0, 0)),
            pl.BlockSpec((rt, 1, 1), lambda r: (r, 0, 0)),
        ),
        out_shape=(
            jax.ShapeDtypeStruct((nc_pad, 1, 1), jnp.float32),
            jax.ShapeDtypeStruct((nc_pad, 1, 1), jnp.float32),
        ),
        compiler_params=pltpu.CompilerParams(dimension_semantics=("parallel",)),
    )(xv)

    cnt = jnp.float32(N * 4 * H * W)                          # elements per channel of y
    s1c = s1[:NC].reshape(N, C).sum(axis=0)
    s2c = s2[:NC].reshape(N, C).sum(axis=0)
    mean = s1c / cnt
    var = jnp.maximum(s2c / cnt - mean * mean, 0.0)           # biased var (PyTorch BN, train)
    scale_c = gamma * jax.lax.rsqrt(var + _EPS)
    shift_c = beta - mean * scale_c
    scale_rows = jnp.tile(scale_c, N).reshape(NC, 1, 1)       # row index = n*C + c
    shift_rows = jnp.tile(shift_c, N).reshape(NC, 1, 1)
    if nc_pad != NC:
        scale_rows = jnp.pad(scale_rows, ((0, nc_pad - NC), (0, 0), (0, 0)))
        shift_rows = jnp.pad(shift_rows, ((0, nc_pad - NC), (0, 0), (0, 0)))

    # ---- pass 2: transposed conv + pixel interleave (batched MXU) + folded BN + ReLU ----
    out = pl.pallas_call(
        _apply_kernel,
        grid=grid,
        in_specs=[
            pl.BlockSpec((rt, 4, Hg, WG), lambda r: (r, 0, 0, 0)),
            pl.BlockSpec((4, WG, 4 * WG), lambda r: (0, 0, 0)),   # constant across grid
            pl.BlockSpec((rt, 1, 1), lambda r: (r, 0, 0)),
            pl.BlockSpec((rt, 1, 1), lambda r: (r, 0, 0)),
        ],
        out_specs=pl.BlockSpec((rt, Hg, 4 * WG), lambda r: (r, 0, 0)),
        out_shape=jax.ShapeDtypeStruct((nc_pad, Hg, 4 * WG), jnp.float32),
        compiler_params=pltpu.CompilerParams(dimension_semantics=("parallel",)),
    )(xv, m2, scale_rows, shift_rows)

    if nc_pad != NC:
        out = out[:NC]
    # (NC, Hg, 4*WG) has identical memory layout to (N, C, 2H, 2W): free reshape, no transpose.
    return out.reshape(N, C, 2 * H, 2 * W)


# --------------------------------------------------------------------------------------
# Reference + test
# --------------------------------------------------------------------------------------
def reference_numpy(x, filts, eps=_EPS):
    """conv_transpose2d(groups=C, stride=2) + BatchNorm2d(train, gamma=1, beta=0) + ReLU."""
    x = np.asarray(x, np.float32)
    N, Cin, H, W = x.shape
    C = Cin // 4
    xg = x.reshape(N, C, 4, H, W)
    y = np.zeros((N, C, 2 * H, 2 * W), np.float32)
    for ki in range(2):
        for kj in range(2):
            acc = np.zeros((N, C, H, W), np.float32)
            for k in range(4):
                acc += xg[:, :, k] * filts[k, 0, ki, kj]
            y[:, :, ki::2, kj::2] = acc
    mean = y.mean(axis=(0, 2, 3), keepdims=True)
    var = y.var(axis=(0, 2, 3), keepdims=True)   # biased, like PyTorch BN normalization
    return np.maximum((y - mean) / np.sqrt(var + eps), 0.0)


if __name__ == "__main__":
    N, Cin, H, W = 2, 8, 16, 16      # in_ch = 8 -> out_ch = C = 2
    C = Cin // 4

    key = jax.random.PRNGKey(0)
    x = jax.random.normal(key, (N, Cin, H, W), dtype=jnp.float32)
    gamma = jnp.ones((C,), jnp.float32)   # BN weight (default init)
    beta = jnp.zeros((C,), jnp.float32)   # BN bias (default init)
    # TODO(synk): BatchNorm running-stat buffer updates (a training-mode side effect) are
    # not replicated; they do not affect the forward output.

    y = jax.block_until_ready(wavelet_unpool(x, gamma, beta))

    assert y.shape == (N, C, 2 * H, 2 * W), y.shape
    y_ref = reference_numpy(np.asarray(x), make_wavelet_filters())
    np.testing.assert_allclose(np.asarray(y), y_ref, rtol=2e-4, atol=2e-4)
    print("KERNEL_OK")
</pallas_src>

<mosaic_0001>
module attributes {stable_mosaic.version = 11 : i64} {
  func.func @_stats_kernel(%arg0: i32, %arg1: memref<1x4x8x32xf32, #tpu.memory_space<vmem>>, %arg2: memref<1x1x1xf32, #tpu.memory_space<vmem>>, %arg3: memref<1x1x1xf32, #tpu.memory_space<vmem>>) attributes {dimension_semantics = [#tpu.dimension_semantics<parallel>], iteration_bounds = array<i64: 4>, scalar_prefetch = 0 : i64, scratch_operands = 0 : i64, tpu.core_type = #tpu.core_type<tc>, window_params = [{transform_indices = @transform_0, window_bounds = array<i64: 1, 4, 8, 32>}, {transform_indices = @transform_1, window_bounds = array<i64: 1, 1, 1>}, {transform_indices = @transform_2, window_bounds = array<i64: 1, 1, 1>}]} {
    %c0 = arith.constant 0 : index
    %c0_0 = arith.constant 0 : index
    %c0_1 = arith.constant 0 : index
    %c0_2 = arith.constant 0 : index
    %0 = vector.load %arg1[%c0, %c0_0, %c0_1, %c0_2] : memref<1x4x8x32xf32, #tpu.memory_space<vmem>>, vector<1x1x8x32xf32>
    %1 = vector.shape_cast %0 : vector<1x1x8x32xf32> to vector<1x8x32xf32>
    %cst = arith.constant dense<0.000000e+00> : vector<1x8xf32>
    %2 = vector.multi_reduction <add>, %1, %cst [2] : vector<1x8x32xf32> to vector<1x8xf32>
    %3 = vector.shape_cast %2 : vector<1x8xf32> to vector<1x8x1xf32>
    %cst_3 = arith.constant dense<0.000000e+00> : vector<1x1xf32>
    %4 = vector.multi_reduction <add>, %3, %cst_3 [1] : vector<1x8x1xf32> to vector<1x1xf32>
    %5 = vector.shape_cast %4 : vector<1x1xf32> to vector<1x1x1xf32>
    %cst_4 = arith.constant 2.000000e+00 : f32
    %6 = vector.broadcast %cst_4 : f32 to vector<1x1x1xf32>
    %7 = arith.mulf %6, %5 : vector<1x1x1xf32>
    %c0_5 = arith.constant 0 : index
    %c0_6 = arith.constant 0 : index
    %c0_7 = arith.constant 0 : index
    %8 = vector.load %arg2[%c0_5, %c0_6, %c0_7] : memref<1x1x1xf32, #tpu.memory_space<vmem>>, vector<1x1x1xf32>
    tpu.vector_store %arg2[%c0_5, %c0_6, %c0_7], %7 {strides = array<i32>} : memref<1x1x1xf32, #tpu.memory_space<vmem>>, vector<1x1x1xf32>,
    %c0_8 = arith.constant 0 : index
    %c0_9 = arith.constant 0 : index
    %c0_10 = arith.constant 0 : index
    %c0_11 = arith.constant 0 : index
    %9 = vector.load %arg1[%c0_8, %c0_9, %c0_10, %c0_11] : memref<1x4x8x32xf32, #tpu.memory_space<vmem>>, vector<1x1x8x32xf32>
    %10 = vector.shape_cast %9 : vector<1x1x8x32xf32> to vector<1x8x32xf32>
    %11 = arith.mulf %10, %10 : vector<1x8x32xf32>
    %cst_12 = arith.constant dense<0.000000e+00> : vector<1x8xf32>
    %12 = vector.multi_reduction <add>, %11, %cst_12 [2] : vector<1x8x32xf32> to vector<1x8xf32>
    %13 = vector.shape_cast %12 : vector<1x8xf32> to vector<1x8x1xf32>
    %cst_13 = arith.constant dense<0.000000e+00> : vector<1x1xf32>
    %14 = vector.multi_reduction <add>, %13, %cst_13 [1] : vector<1x8x1xf32> to vector<1x1xf32>
    %15 = vector.shape_cast %14 : vector<1x1xf32> to vector<1x1x1xf32>
    %c0_14 = arith.constant 0 : index
    %c1 = arith.constant 1 : index
    %c0_15 = arith.constant 0 : index
    %c0_16 = arith.constant 0 : index
    %16 = vector.load %arg1[%c0_14, %c1, %c0_15, %c0_16] : memref<1x4x8x32xf32, #tpu.memory_space<vmem>>, vector<1x1x8x32xf32>
    %17 = vector.shape_cast %16 : vector<1x1x8x32xf32> to vector<1x8x32xf32>
    %18 = arith.mulf %17, %17 : vector<1x8x32xf32>
    %cst_17 = arith.constant dense<0.000000e+00> : vector<1x8xf32>
    %19 = vector.multi_reduction <add>, %18, %cst_17 [2] : vector<1x8x32xf32> to vector<1x8xf32>
    %20 = vector.shape_cast %19 : vector<1x8xf32> to vector<1x8x1xf32>
    %cst_18 = arith.constant dense<0.000000e+00> : vector<1x1xf32>
    %21 = vector.multi_reduction <add>, %20, %cst_18 [1] : vector<1x8x1xf32> to vector<1x1xf32>
    %22 = vector.shape_cast %21 : vector<1x1xf32> to vector<1x1x1xf32>
    %23 = arith.addf %15, %22 : vector<1x1x1xf32>
    %c0_19 = arith.constant 0 : index
    %c2 = arith.constant 2 : index
    %c0_20 = arith.constant 0 : index
    %c0_21 = arith.constant 0 : index
    %24 = vector.load %arg1[%c0_19, %c2, %c0_20, %c0_21] : memref<1x4x8x32xf32, #tpu.memory_space<vmem>>, vector<1x1x8x32xf32>
    %25 = vector.shape_cast %24 : vector<1x1x8x32xf32> to vector<1x8x32xf32>
    %26 = arith.mulf %25, %25 : vector<1x8x32xf32>
    %cst_22 = arith.constant dense<0.000000e+00> : vector<1x8xf32>
    %27 = vector.multi_reduction <add>, %26, %cst_22 [2] : vector<1x8x32xf32> to vector<1x8xf32>
    %28 = vector.shape_cast %27 : vector<1x8xf32> to vector<1x8x1xf32>
    %cst_23 = arith.constant dense<0.000000e+00> : vector<1x1xf32>
    %29 = vector.multi_reduction <add>, %28, %cst_23 [1] : vector<1x8x1xf32> to vector<1x1xf32>
    %30 = vector.shape_cast %29 : vector<1x1xf32> to vector<1x1x1xf32>
    %31 = arith.addf %23, %30 : vector<1x1x1xf32>
    %c0_24 = arith.constant 0 : index
    %c3 = arith.constant 3 : index
    %c0_25 = arith.constant 0 : index
    %c0_26 = arith.constant 0 : index
    %32 = vector.load %arg1[%c0_24, %c3, %c0_25, %c0_26] : memref<1x4x8x32xf32, #tpu.memory_space<vmem>>, vector<1x1x8x32xf32>
    %33 = vector.shape_cast %32 : vector<1x1x8x32xf32> to vector<1x8x32xf32>
    %34 = arith.mulf %33, %33 : vector<1x8x32xf32>
    %cst_27 = arith.constant dense<0.000000e+00> : vector<1x8xf32>
    %35 = vector.multi_reduction <add>, %34, %cst_27 [2] : vector<1x8x32xf32> to vector<1x8xf32>
    %36 = vector.shape_cast %35 : vector<1x8xf32> to vector<1x8x1xf32>
    %cst_28 = arith.constant dense<0.000000e+00> : vector<1x1xf32>
    %37 = vector.multi_reduction <add>, %36, %cst_28 [1] : vector<1x8x1xf32> to vector<1x1xf32>
    %38 = vector.shape_cast %37 : vector<1x1xf32> to vector<1x1x1xf32>
    %39 = arith.addf %31, %38 : vector<1x1x1xf32>
    %c0_29 = arith.constant 0 : index
    %c0_30 = arith.constant 0 : index
    %c0_31 = arith.constant 0 : index
    %40 = vector.load %arg3[%c0_29, %c0_30, %c0_31] : memref<1x1x1xf32, #tpu.memory_space<vmem>>, vector<1x1x1xf32>
    tpu.vector_store %arg3[%c0_29, %c0_30, %c0_31], %39 {strides = array<i32>} : memref<1x1x1xf32, #tpu.memory_space<vmem>>, vector<1x1x1xf32>,
    return
  }
  func.func @transform_0(%arg0: i32) -> (i32, i32, i32, i32) {
    %c0_i32 = arith.constant 0 : i32
    %c0_i32_0 = arith.constant 0 : i32
    %c0_i32_1 = arith.constant 0 : i32
    %c0_i32_2 = arith.constant 0 : i32
    return %arg0, %c0_i32, %c0_i32_0, %c0_i32_1 : i32, i32, i32, i32
  }
  func.func @transform_1(%arg0: i32) -> (i32, i32, i32) {
    %c0_i32 = arith.constant 0 : i32
    %c0_i32_0 = arith.constant 0 : i32
    %c0_i32_1 = arith.constant 0 : i32
    return %arg0, %c0_i32, %c0_i32_0 : i32, i32, i32
  }
  func.func @transform_2(%arg0: i32) -> (i32, i32, i32) {
    %c0_i32 = arith.constant 0 : i32
    %c0_i32_0 = arith.constant 0 : i32
    %c0_i32_1 = arith.constant 0 : i32
    return %arg0, %c0_i32, %c0_i32_0 : i32, i32, i32
  }
}

module attributes {stable_mosaic.version = 11 : i64} {
  func.func @_apply_kernel(%arg0: i32, %arg1: memref<1x4x8x32xf32, #tpu.memory_space<vmem>>, %arg2: memref<4x32x128xf32, #tpu.memory_space<vmem>>, %arg3: memref<1x1x1xf32, #tpu.memory_space<vmem>>, %arg4: memref<1x1x1xf32, #tpu.memory_space<vmem>>, %arg5: memref<1x8x128xf32, #tpu.memory_space<vmem>>) attributes {dimension_semantics = [#tpu.dimension_semantics<parallel>], iteration_bounds = array<i64: 4>, scalar_prefetch = 0 : i64, scratch_operands = 0 : i64, tpu.core_type = #tpu.core_type<tc>, window_params = [{transform_indices = @transform_0, window_bounds = array<i64: 1, 4, 8, 32>}, {pipeline_mode = #tpu.pipeline_mode<synchronous>, transform_indices = @transform_1, window_bounds = array<i64: 4, 32, 128>}, {transform_indices = @transform_2, window_bounds = array<i64: 1, 1, 1>}, {transform_indices = @transform_3, window_bounds = array<i64: 1, 1, 1>}, {transform_indices = @transform_4, window_bounds = array<i64: 1, 8, 128>}]} {
    %c0 = arith.constant 0 : index
    %c0_0 = arith.constant 0 : index
    %c0_1 = arith.constant 0 : index
    %c0_2 = arith.constant 0 : index
    %0 = vector.load %arg1[%c0, %c0_0, %c0_1, %c0_2] : memref<1x4x8x32xf32, #tpu.memory_space<vmem>>, vector<1x1x8x32xf32>
    %1 = vector.shape_cast %0 : vector<1x1x8x32xf32> to vector<1x8x32xf32>
    %2 = vector.shape_cast %1 : vector<1x8x32xf32> to vector<8x32xf32>
    %c0_3 = arith.constant 0 : index
    %c0_4 = arith.constant 0 : index
    %c0_5 = arith.constant 0 : index
    %3 = vector.load %arg2[%c0_3, %c0_4, %c0_5] : memref<4x32x128xf32, #tpu.memory_space<vmem>>, vector<1x32x128xf32>
    %4 = vector.shape_cast %3 : vector<1x32x128xf32> to vector<32x128xf32>
    %cst = arith.constant dense<0.000000e+00> : vector<8x128xf32>
    %5 = tpu.matmul %2, %4, %cst {dimension_numbers = #tpu.dot_dimension_numbers<[1], [0], [0], [1], [0, 0, 1, 1], [], []>, precision = #tpu.contract_precision<fp32>} : vector<8x32xf32>, vector<32x128xf32>, vector<8x128xf32> -> vector<8x128xf32>
    %c0_6 = arith.constant 0 : index
    %c1 = arith.constant 1 : index
    %c0_7 = arith.constant 0 : index
    %c0_8 = arith.constant 0 : index
    %6 = vector.load %arg1[%c0_6, %c1, %c0_7, %c0_8] : memref<1x4x8x32xf32, #tpu.memory_space<vmem>>, vector<1x1x8x32xf32>
    %7 = vector.shape_cast %6 : vector<1x1x8x32xf32> to vector<1x8x32xf32>
    %8 = vector.shape_cast %7 : vector<1x8x32xf32> to vector<8x32xf32>
    %c1_9 = arith.constant 1 : index
    %c0_10 = arith.constant 0 : index
    %c0_11 = arith.constant 0 : index
    %9 = vector.load %arg2[%c1_9, %c0_10, %c0_11] : memref<4x32x128xf32, #tpu.memory_space<vmem>>, vector<1x32x128xf32>
    %10 = vector.shape_cast %9 : vector<1x32x128xf32> to vector<32x128xf32>
    %cst_12 = arith.constant dense<0.000000e+00> : vector<8x128xf32>
    %11 = tpu.matmul %8, %10, %cst_12 {dimension_numbers = #tpu.dot_dimension_numbers<[1], [0], [0], [1], [0, 0, 1, 1], [], []>, precision = #tpu.contract_precision<fp32>} : vector<8x32xf32>, vector<32x128xf32>, vector<8x128xf32> -> vector<8x128xf32>
    %12 = arith.addf %5, %11 : vector<8x128xf32>
    %c0_13 = arith.constant 0 : index
    %c2 = arith.constant 2 : index
    %c0_14 = arith.constant 0 : index
    %c0_15 = arith.constant 0 : index
    %13 = vector.load %arg1[%c0_13, %c2, %c0_14, %c0_15] : memref<1x4x8x32xf32, #tpu.memory_space<vmem>>, vector<1x1x8x32xf32>
    %14 = vector.shape_cast %13 : vector<1x1x8x32xf32> to vector<1x8x32xf32>
    %15 = vector.shape_cast %14 : vector<1x8x32xf32> to vector<8x32xf32>
    %c2_16 = arith.constant 2 : index
    %c0_17 = arith.constant 0 : index
    %c0_18 = arith.constant 0 : index
    %16 = vector.load %arg2[%c2_16, %c0_17, %c0_18] : memref<4x32x128xf32, #tpu.memory_space<vmem>>, vector<1x32x128xf32>
    %17 = vector.shape_cast %16 : vector<1x32x128xf32> to vector<32x128xf32>
    %cst_19 = arith.constant dense<0.000000e+00> : vector<8x128xf32>
    %18 = tpu.matmul %15, %17, %cst_19 {dimension_numbers = #tpu.dot_dimension_numbers<[1], [0], [0], [1], [0, 0, 1, 1], [], []>, precision = #tpu.contract_precision<fp32>} : vector<8x32xf32>, vector<32x128xf32>, vector<8x128xf32> -> vector<8x128xf32>
    %19 = arith.addf %12, %18 : vector<8x128xf32>
    %c0_20 = arith.constant 0 : index
    %c3 = arith.constant 3 : index
    %c0_21 = arith.constant 0 : index
    %c0_22 = arith.constant 0 : index
    %20 = vector.load %arg1[%c0_20, %c3, %c0_21, %c0_22] : memref<1x4x8x32xf32, #tpu.memory_space<vmem>>, vector<1x1x8x32xf32>
    %21 = vector.shape_cast %20 : vector<1x1x8x32xf32> to vector<1x8x32xf32>
    %22 = vector.shape_cast %21 : vector<1x8x32xf32> to vector<8x32xf32>
    %c3_23 = arith.constant 3 : index
    %c0_24 = arith.constant 0 : index
    %c0_25 = arith.constant 0 : index
    %23 = vector.load %arg2[%c3_23, %c0_24, %c0_25] : memref<4x32x128xf32, #tpu.memory_space<vmem>>, vector<1x32x128xf32>
    %24 = vector.shape_cast %23 : vector<1x32x128xf32> to vector<32x128xf32>
    %cst_26 = arith.constant dense<0.000000e+00> : vector<8x128xf32>
    %25 = tpu.matmul %22, %24, %cst_26 {dimension_numbers = #tpu.dot_dimension_numbers<[1], [0], [0], [1], [0, 0, 1, 1], [], []>, precision = #tpu.contract_precision<fp32>} : vector<8x32xf32>, vector<32x128xf32>, vector<8x128xf32> -> vector<8x128xf32>
    %26 = arith.addf %19, %25 : vector<8x128xf32>
    %27 = vector.shape_cast %26 : vector<8x128xf32> to vector<1x8x128xf32>
    %c0_27 = arith.constant 0 : index
    %c0_28 = arith.constant 0 : index
    %c0_29 = arith.constant 0 : index
    %28 = vector.load %arg3[%c0_27, %c0_28, %c0_29] : memref<1x1x1xf32, #tpu.memory_space<vmem>>, vector<1x1x1xf32>
    %29 = vector.broadcast %28 : vector<1x1x1xf32> to vector<1x8x128xf32>
    %30 = arith.mulf %27, %29 : vector<1x8x128xf32>
    %c0_30 = arith.constant 0 : index
    %c0_31 = arith.constant 0 : index
    %c0_32 = arith.constant 0 : index
    %31 = vector.load %arg4[%c0_30, %c0_31, %c0_32] : memref<1x1x1xf32, #tpu.memory_space<vmem>>, vector<1x1x1xf32>
    %32 = vector.broadcast %31 : vector<1x1x1xf32> to vector<1x8x128xf32>
    %33 = arith.addf %30, %32 : vector<1x8x128xf32>
    %cst_33 = arith.constant 0.000000e+00 : f32
    %34 = vector.broadcast %cst_33 : f32 to vector<1x8x128xf32>
    %35 = arith.maximumf %33, %34 : vector<1x8x128xf32>
    %c0_34 = arith.constant 0 : index
    %c0_35 = arith.constant 0 : index
    %c0_36 = arith.constant 0 : index
    %36 = vector.load %arg5[%c0_34, %c0_35, %c0_36] : memref<1x8x128xf32, #tpu.memory_space<vmem>>, vector<1x8x128xf32>
    tpu.vector_store %arg5[%c0_34, %c0_35, %c0_36], %35 {strides = array<i32>} : memref<1x8x128xf32, #tpu.memory_space<vmem>>, vector<1x8x128xf32>,
    return
  }
  func.func @transform_0(%arg0: i32) -> (i32, i32, i32, i32) {
    %c0_i32 = arith.constant 0 : i32
    %c0_i32_0 = arith.constant 0 : i32
    %c0_i32_1 = arith.constant 0 : i32
    %c0_i32_2 = arith.constant 0 : i32
    return %arg0, %c0_i32, %c0_i32_0, %c0_i32_1 : i32, i32, i32, i32
  }
  func.func @transform_1(%arg0: i32) -> (i32, i32, i32) {
    %c0_i32 = arith.constant 0 : i32
    %c0_i32_0 = arith.constant 0 : i32
    %c0_i32_1 = arith.constant 0 : i32
    %c0_i32_2 = arith.constant 0 : i32
    return %c0_i32, %c0_i32_0, %c0_i32_1 : i32, i32, i32
  }
  func.func @transform_2(%arg0: i32) -> (i32, i32, i32) {
    %c0_i32 = arith.constant 0 : i32
    %c0_i32_0 = arith.constant 0 : i32
    %c0_i32_1 = arith.constant 0 : i32
    return %arg0, %c0_i32, %c0_i32_0 : i32, i32, i32
  }
  func.func @transform_3(%arg0: i32) -> (i32, i32, i32) {
    %c0_i32 = arith.constant 0 : i32
    %c0_i32_0 = arith.constant 0 : i32
    %c0_i32_1 = arith.constant 0 : i32
    return %arg0, %c0_i32, %c0_i32_0 : i32, i32, i32
  }
  func.func @transform_4(%arg0: i32) -> (i32, i32, i32) {
    %c0_i32 = arith.constant 0 : i32
    %c0_i32_0 = arith.constant 0 : i32
    %c0_i32_1 = arith.constant 0 : i32
    return %arg0, %c0_i32, %c0_i32_0 : i32, i32, i32
  }
}

</mosaic_0001>

<llo_original>
// kernel: tile.18
$region0: #{tile.18}
  #allocation0 [shape = 's32[1]{0}', space=sflag, size = 0x4, scoped, tag = 'scoped memory for tile.18']
  %s0 = inlined_call_operand.vmem [shape: f32[2], index: 0, kind: input, shape index: {}]
  %s1 = inlined_call_operand.vmem [shape: f32[2,2], index: 1, kind: output, shape index: {}]
  // Predicated region
  $region2: #{tile.18} parent=0 // pred_check
    _
  $region3: #{tile.18} parent=0 // pred_check_branch
    %3 = sbr.rel (0) target = $region5
  $region4: #{tile.18} parent=0 // pred_region
    _
  $region5: #{tile.18} parent=0 // pred_fallthru
    _
  %v4 = vld [vmem:[%s0] ss:$0 sm:$0xff]
  %5 = vst [vmem:[%s1] sm:$0x3] %v4

// kernel: tile.1
$region0: #{tile.1}
  %s0 = inlined_call_operand.vmem [shape: f32[2,2], index: 0, kind: input, shape index: {}]
  %s1 = inlined_call_operand.vmem [shape: f32[4,1,1], index: 1, kind: output, shape index: {}]
  $region1: #{tile.1} parent=0
    #allocation0 [shape = 'u8[16384]{0}', space=vmem, size = 0x4000, scoped, tag = 'scoped mem for output reshape']
    #allocation1 [shape = 'u8[4096]{0}', space=vmem, size = 0x1000, scoped, tag = 'scoped mem for input reshape']
    %s3 = sshll.u32 1, 2
    %s4 = ssub.s32 %s3, 1
    %v5 = vld [vmem:[%s0] sm:%s4]
    %6 = vst [vmem:[#allocation1] sm:%s4] %v5
    %v7 = vld [vmem:[#allocation1] sm:$0x3]
    %vm8 = vcmask 7168
    %9 = vst.msk [vmem:[#allocation0] ss:$16 sm:$0x3] %vm8, %v7
    %v10 = vld [vmem:[#allocation1] sm:$0x3]
    %11 = vrot.lane.b32.xlu0 %v10, 127
    %v12 = vpop.permute.xlu0 %11
    %vm13 = vcmask 7168
    %s14 = scalar_lea.vmem [#allocation0], 8
    %15 = vst.msk [vmem:[%s14] ss:$16 sm:$0x3] %vm13, %v12
    %s17 = sshll.u32 1, 1
    %s18 = ssub.s32 %s17, 1
    %v20 = vld [vmem:[#allocation0] sm:%s18]
    %s21 = sshll.u32 1, 1
    %s22 = ssub.s32 %s21, 1
    %23 = vst [vmem:[%s1] sm:%s22] %v20
    %s24 = scalar_lea.vmem [#allocation0], 8
    %v25 = vld [vmem:[%s24] sm:%s18]
    %s26 = sshll.u32 1, 1
    %s27 = ssub.s32 %s26, 1
    %s28 = scalar_lea.vmem %s1, 1
    %29 = vst [vmem:[%s28] sm:%s27] %v25
    %s30 = scalar_lea.vmem [#allocation0], 16
    %v31 = vld [vmem:[%s30] sm:%s18]
    %s32 = sshll.u32 1, 1
    %s33 = ssub.s32 %s32, 1
    %s34 = smul.addr 1, 2
    %s35 = scalar_lea.vmem %s1, %s34
    %36 = vst [vmem:[%s35] sm:%s33] %v31
    %s37 = scalar_lea.vmem [#allocation0], 24
    %v38 = vld [vmem:[%s37] sm:%s18]
    %s39 = sshll.u32 1, 1
    %s40 = ssub.s32 %s39, 1
    %s41 = smul.addr 1, 3
    %s42 = scalar_lea.vmem %s1, %s41
    %43 = vst [vmem:[%s42] sm:%s40] %v38

// kernel: wavelet_unpool.2
$region0: #{wavelet_unpool.2}
  #allocation0 [shape = 'u32[]', space=smem, size = 0x4, offset = 0x4, fixed_abs, tag = 'smem constant byte address 0x4 - core index']
  #allocation1 [shape = 'u32[144,128]{1,0:T(1,128)}', space=vmem, size = 0x12000, scoped, tag = 'internal scratch']
  %s0 = inlined_call_operand.vmem [shape: f32[4,4,8,32], index: 0, kind: input, shape index: {}]
  %s1 = inlined_call_operand.vmem [shape: f32[4,1,1], index: 1, kind: output, shape index: {0}]
  %s2 = inlined_call_operand.vmem [shape: f32[4,1,1], index: 2, kind: output, shape index: {1}]
  %3 = xla_tuple %s1, %s2
  %s4 = sld [smem:[#allocation0]]
  $region45: #{wavelet_unpool.2} parent=0
    _
  %s6 = ssub.s32 1, %s4
  %s7 = scalar_select 0, %s6, %s4
  loop: start=0, step=1, limit=6
  $region2: #{wavelet_unpool.2} parent=0 // loop_pre_header
    _
  $region3: #{wavelet_unpool.2} parent=0 // loop_header
    %s9 = sphi 0, %s13
    %p10 = scmp.ge.s32.totalorder %s9, 6
    %s19 = sphi 0, %s21
    %s22 = sphi 0, %s19
    %s23 = sphi 0, %s22
    %s39 = sphi 0, %s23
    %s45 = sphi 0, %s47
    %s48 = sphi 0, %s45
    %s49 = sphi 0, %s48
    %s65 = sphi 0, %s49
    %s71 = sphi 0, %s73
    %s74 = sphi 0, %s71
    %s75 = sphi 0, %s74
    %s91 = sphi 0, %s75
  $region4: #{wavelet_unpool.2} parent=0 // loop_header_branch
    %12 = sbr.rel (%p10) target = $region8
  $region5: #{wavelet_unpool.2} parent=0 // loop_body
    %s14 = ssub.s32 %s9, 1
    %s15 = ssub.s32 %s9, 2
    %s16 = sadd.s32 %s9, 1
    %s17 = ssub.s32 %s9, %s16
    %p18 = scmp.eq.s32.totalorder %s17, 0
    %s20 = sadd.s32 %s19, 1
    %s21 = scalar_select %p18, %s19, %s20
    %p24 = pneg %p18
    %p25 = scmp.eq.s32.totalorder %s9, 3
    %p26 = por %p24, %p25
    %p27 = scmp.ne.s32.totalorder %s19, %s22
    %p28 = scmp.eq.s32.totalorder %s9, 0
    %p29 = por %p27, %p28
    %p30 = scmp.ne.s32.totalorder %s19, %s22
    %p31 = scmp.eq.s32.totalorder %s14, 3
    %p32 = por %p30, %p31
    %p33 = scmp.ne.s32.totalorder %s22, %s23
    %p34 = scmp.eq.s32.totalorder %s14, 0
    %p35 = por %p33, %p34
    %p36 = scmp.ne.s32.totalorder %s22, %s23
    %p37 = scmp.eq.s32.totalorder %s15, 3
    %p38 = por %p36, %p37
    %p40 = scmp.ne.s32.totalorder %s23, %s39
    %p41 = scmp.eq.s32.totalorder %s15, 0
    %p42 = por %p40, %p41
    %s43 = ssub.s32 %s9, %s16
    %p44 = scmp.eq.s32.totalorder %s43, 0
    %s46 = sadd.s32 %s45, 1
    %s47 = scalar_select %p44, %s45, %s46
    %p50 = pneg %p44
    %p51 = scmp.eq.s32.totalorder %s9, 3
    %p52 = por %p50, %p51
    %p53 = scmp.ne.s32.totalorder %s45, %s48
    %p54 = scmp.eq.s32.totalorder %s9, 0
    %p55 = por %p53, %p54
    %p56 = scmp.ne.s32.totalorder %s45, %s48
    %p57 = scmp.eq.s32.totalorder %s14, 3
    %p58 = por %p56, %p57
    %p59 = scmp.ne.s32.totalorder %s48, %s49
    %p60 = scmp.eq.s32.totalorder %s14, 0
    %p61 = por %p59, %p60
    %p62 = scmp.ne.s32.totalorder %s48, %s49
    %p63 = scmp.eq.s32.totalorder %s15, 3
    %p64 = por %p62, %p63
    %p66 = scmp.ne.s32.totalorder %s49, %s65
    %p67 = scmp.eq.s32.totalorder %s15, 0
    %p68 = por %p66, %p67
    %s69 = ssub.s32 %s9, %s16
    %p70 = scmp.eq.s32.totalorder %s69, 0
    %s72 = sadd.s32 %s71, 1
    %s73 = scalar_select %p70, %s71, %s72
    %p76 = pneg %p70
    %p77 = scmp.eq.s32.totalorder %s9, 3
    %p78 = por %p76, %p77
    %p79 = scmp.ne.s32.totalorder %s71, %s74
    %p80 = scmp.eq.s32.totalorder %s9, 0
    %p81 = por %p79, %p80
    %p82 = scmp.ne.s32.totalorder %s71, %s74
    %p83 = scmp.eq.s32.totalorder %s14, 3
    %p84 = por %p82, %p83
    %p85 = scmp.ne.s32.totalorder %s74, %s75
    %p86 = scmp.eq.s32.totalorder %s14, 0
    %p87 = por %p85, %p86
    %p88 = scmp.ne.s32.totalorder %s74, %s75
    %p89 = scmp.eq.s32.totalorder %s15, 3
    %p90 = por %p88, %p89
    %p92 = scmp.ne.s32.totalorder %s75, %s91
    %p93 = scmp.eq.s32.totalorder %s15, 0
    %p94 = por %p92, %p93
    %p95 = scmp.le.s32.totalorder 1, %s9
    %p96 = scmp.lt.s32.totalorder %s9, 5
    %p97 = pnand %p95, %p96
    %p98 = pneg %p97
    // Predicated region
    $region9: #{wavelet_unpool.2} parent=5 // pred_check
      _
    $region10: #{wavelet_unpool.2} parent=5 // pred_check_branch
      %100 = sbr.rel (%p97) target = $region12
    $region11: #{wavelet_unpool.2} parent=5 // pred_region
      %s101 = ssub.s32 %s9, 1
    $region12: #{wavelet_unpool.2} parent=5 // pred_fallthru
      _
    %p102 = scmp.lt.s32.totalorder %s9, 4
    // Predicated region
    $region13: #{wavelet_unpool.2} parent=5 // pred_check
      %p103 = pneg %p102
    $region14: #{wavelet_unpool.2} parent=5 // pred_check_branch
      %105 = sbr.rel (%p103) target = $region16
    $region15: #{wavelet_unpool.2} parent=5 // pred_region
      // Predicated region
      $region17: #{wavelet_unpool.2} parent=15 // pred_check
        %p106 = pneg %p29
      $region18: #{wavelet_unpool.2} parent=15 // pred_check_branch
        %108 = sbr.rel (%p106) target = $region20
      $region19: #{wavelet_unpool.2} parent=15 // pred_region
        %p109 = scmp.lt.s32.totalorder %s9, 3
        %s110 = scalar_select %p109, %s9, 3
        %s111 = smul.addr %s110, 4
        %s112 = smul.addr %s111, 8
        %s113 = scalar_lea.vmem %s0, %s112
      $region20: #{wavelet_unpool.2} parent=15 // pred_fallthru
        _
    $region16: #{wavelet_unpool.2} parent=5 // pred_fallthru
      _
    %p114 = scmp.le.s32.totalorder 1, %s9
    %p115 = scmp.lt.s32.totalorder %s9, 5
    %p116 = pnand %p114, %p115
    %p117 = pneg %p116
    // Predicated region
    $region21: #{wavelet_unpool.2} parent=5 // pred_check
      _
    $region22: #{wavelet_unpool.2} parent=5 // pred_check_branch
      %119 = sbr.rel (%p116) target = $region24
    $region23: #{wavelet_unpool.2} parent=5 // pred_region
      %s120 = ssub.s32 %s9, 1
      %p121 = scmp.lt.s32.totalorder %s14, 3
      %s122 = scalar_select %p121, %s14, 3
      %s123 = smul.addr %s122, 4
      %s124 = smul.addr %s123, 8
      %s125 = scalar_lea.vmem %s0, %s124
      %p126 = pneg %p35
      %p127 = pneg %p32
      %p128 = pneg %p61
      %p129 = pneg %p58
      %p130 = scmp.lt.s32.totalorder %s14, 3
      %s131 = scalar_select %p130, %s14, 3
      %s132 = scalar_lea.vmem %s1, %s131
      %p133 = pneg %p87
      %p134 = pneg %p84
      %p135 = scmp.lt.s32.totalorder %s14, 3
      %s136 = scalar_select %p135, %s14, 3
      %s137 = scalar_lea.vmem %s2, %s136
      %p138 = scmp.lt.s32.totalorder %s14, 3
      %s139 = scalar_select %p138, %s14, 3
      %s140 = smul.addr %s139, 4
      %s141 = smul.addr %s140, 8
      %s142 = scalar_lea.vmem %s0, %s141
      %p143 = scmp.lt.s32.totalorder %s14, 3
      %s144 = scalar_select %p143, %s14, 3
      %s145 = scalar_lea.vmem %s1, %s144
      %p146 = scmp.lt.s32.totalorder %s14, 3
      %s147 = scalar_select %p146, %s14, 3
      %s148 = scalar_lea.vmem %s2, %s147
      %v149 = vld [vmem:[%s142] sm:$0xff]
      %vm150 = vcmask 261120
      %v151 = vsel %vm150, %v149, 0.0
      %152 = vadd.xlane.f32.xlu0 %v151
      %v153 = vpop.xlane.xlu0 %152
      %v154 = vrot.slane %v153, 4
      %v155 = vadd.f32 %v153, %v154
      %v156 = vrot.slane %v155, 2
      %v157 = vadd.f32 %v155, %v156
      %v158 = vrot.slane %v157, 1
      %v159 = vadd.f32 %v157, %v158
      %v160 = vmul.f32 %v159, 2.0
      %vm161 = vcmask 0
      %162 = vst.msk [vmem:[%s145] sm:$0x1] %vm161, %v160
      %v163 = vld [vmem:[%s142] sm:$0xff]
      %v164 = vmul.f32 %v163, %v163
      %v165 = vsel %vm150, %v164, 0.0
      %166 = vadd.xlane.f32.xlu0 %v165
      %v167 = vpop.xlane.xlu0 %166
      %v168 = vrot.slane %v167, 4
      %v169 = vadd.f32 %v167, %v168
      %v170 = vrot.slane %v169, 2
      %v171 = vadd.f32 %v169, %v170
      %v172 = vrot.slane %v171, 1
      %v173 = vadd.f32 %v171, %v172
      %s174 = scalar_lea.vmem %s142, 8
      %v175 = vld [vmem:[%s174] sm:$0xff]
      %v176 = vmul.f32 %v175, %v175
      %v177 = vsel %vm150, %v176, 0.0
      %178 = vadd.xlane.f32.xlu0 %v177
      %v179 = vpop.xlane.xlu0 %178
      %v180 = vrot.slane %v179, 4
      %v181 = vadd.f32 %v179, %v180
      %v182 = vrot.slane %v181, 2
      %v183 = vadd.f32 %v181, %v182
      %v184 = vrot.slane %v183, 1
      %v185 = vadd.f32 %v183, %v184
      %v186 = vadd.f32 %v173, %v185
      %s187 = scalar_lea.vmem %s142, 16
      %v188 = vld [vmem:[%s187] sm:$0xff]
      %v189 = vmul.f32 %v188, %v188
      %v190 = vsel %vm150, %v189, 0.0
      %191 = vadd.xlane.f32.xlu0 %v190
      %v192 = vpop.xlane.xlu0 %191
      %v193 = vrot.slane %v192, 4
      %v194 = vadd.f32 %v192, %v193
      %v195 = vrot.slane %v194, 2
      %v196 = vadd.f32 %v194, %v195
      %v197 = vrot.slane %v196, 1
      %v198 = vadd.f32 %v196, %v197
      %v199 = vadd.f32 %v186, %v198
      %s200 = scalar_lea.vmem %s142, 24
      %v201 = vld [vmem:[%s200] sm:$0xff]
      %v202 = vmul.f32 %v201, %v201
      %v203 = vsel %vm150, %v202, 0.0
      %204 = vadd.xlane.f32.xlu0 %v203
      %v205 = vpop.xlane.xlu0 %204
      %v206 = vrot.slane %v205, 4
      %v207 = vadd.f32 %v205, %v206
      %v208 = vrot.slane %v207, 2
      %v209 = vadd.f32 %v207, %v208
      %v210 = vrot.slane %v209, 1
      %v211 = vadd.f32 %v209, %v210
      %v212 = vadd.f32 %v199, %v211
      %213 = vst.msk [vmem:[%s148] sm:$0x1] %vm161, %v212
      %p214 = scmp.lt.s32.totalorder %s14, 3
      %s215 = scalar_select %p214, %s14, 3
      %s216 = scalar_lea.vmem %s1, %s215
      %p217 = scmp.lt.s32.totalorder %s14, 3
      %s218 = scalar_select %p217, %s14, 3
      %s219 = scalar_lea.vmem %s2, %s218
      // Predicated region
      $region25: #{wavelet_unpool.2} parent=23 // pred_check
        %p220 = pneg %p58
      $region26: #{wavelet_unpool.2} parent=23 // pred_check_branch
        %222 = sbr.rel (%p220) target = $region28
      $region27: #{wavelet_unpool.2} parent=23 // pred_region
        _
      $region28: #{wavelet_unpool.2} parent=23 // pred_fallthru
        _
      // Predicated region
      $region29: #{wavelet_unpool.2} parent=23 // pred_check
        %p223 = pneg %p84
      $region30: #{wavelet_unpool.2} parent=23 // pred_check_branch
        %225 = sbr.rel (%p223) target = $region32
      $region31: #{wavelet_unpool.2} parent=23 // pred_region
        _
      $region32: #{wavelet_unpool.2} parent=23 // pred_fallthru
        _
    $region24: #{wavelet_unpool.2} parent=5 // pred_fallthru
      _
    %p226 = scmp.le.s32.totalorder 2, %s9
    // Predicated region
    $region33: #{wavelet_unpool.2} parent=5 // pred_check
      %p227 = pneg %p226
    $region34: #{wavelet_unpool.2} parent=5 // pred_check_branch
      %229 = sbr.rel (%p227) target = $region36
    $region35: #{wavelet_unpool.2} parent=5 // pred_region
      %s230 = ssub.s32 %s9, 2
      // Predicated region
      $region37: #{wavelet_unpool.2} parent=35 // pred_check
        %p231 = pneg %p64
      $region38: #{wavelet_unpool.2} parent=35 // pred_check_branch
        %233 = sbr.rel (%p231) target = $region40
      $region39: #{wavelet_unpool.2} parent=35 // pred_region
        %p234 = scmp.lt.s32.totalorder %s15, 3
        %s235 = scalar_select %p234, %s15, 3
        %s236 = scalar_lea.vmem %s1, %s235
      $region40: #{wavelet_unpool.2} parent=35 // pred_fallthru
        _
      // Predicated region
      $region41: #{wavelet_unpool.2} parent=35 // pred_check
        %p237 = pneg %p90
      $region42: #{wavelet_unpool.2} parent=35 // pred_check_branch
        %239 = sbr.rel (%p237) target = $region44
      $region43: #{wavelet_unpool.2} parent=35 // pred_region
        %p240 = scmp.lt.s32.totalorder %s15, 3
        %s241 = scalar_select %p240, %s15, 3
        %s242 = scalar_lea.vmem %s2, %s241
      $region44: #{wavelet_unpool.2} parent=35 // pred_fallthru
        _
    $region36: #{wavelet_unpool.2} parent=5 // pred_fallthru
      _
  $region6: #{wavelet_unpool.2} parent=0 // loop_footer
    %s13 = sadd.s32 1, %s9
  $region7: #{wavelet_unpool.2} parent=0 // loop_footer_branch
    %8 = sbr.rel target = $region3
  $region8: #{wavelet_unpool.2} parent=0 // loop_exit
    _

// kernel: wavelet_unpool.3
$region0: #{wavelet_unpool.3}
  #allocation0 [shape = 'u32[]', space=smem, size = 0x4, offset = 0x4, fixed_abs, tag = 'smem constant byte address 0x4 - core index']
  #allocation1 [shape = 'u32[144,128]{1,0:T(1,128)}', space=vmem, size = 0x12000, scoped, tag = 'internal scratch']
  %s0 = inlined_call_operand.vmem [shape: f32[4,4,8,32], index: 0, kind: input, shape index: {}]
  %s1 = inlined_call_operand.vmem [shape: f32[4,32,128], index: 1, kind: input, shape index: {}]
  %s2 = inlined_call_operand.vmem [shape: f32[4,1,1], index: 2, kind: input, shape index: {}]
  %s3 = inlined_call_operand.vmem [shape: f32[4,1,1], index: 3, kind: input, shape index: {}]
  %s4 = inlined_call_operand.vmem [shape: f32[4,8,128], index: 4, kind: output, shape index: {}]
  %s5 = sld [smem:[#allocation0]]
  $region49: #{wavelet_unpool.3} parent=0
    _
  %s7 = ssub.s32 1, %s5
  %s8 = scalar_select 0, %s7, %s5
  loop: start=0, step=1, limit=6
  $region2: #{wavelet_unpool.3} parent=0 // loop_pre_header
    _
  $region3: #{wavelet_unpool.3} parent=0 // loop_header
    %s10 = sphi 0, %s14
    %p11 = scmp.ge.s32.totalorder %s10, 6
    %s20 = sphi 0, %s22
    %s23 = sphi 0, %s20
    %s24 = sphi 0, %s23
    %s40 = sphi 0, %s24
    %s44 = sphi 0, %s44
    %s46 = sphi 0, %s44
    %s47 = sphi 0, %s46
    %s61 = sphi 0, %s47
    %s67 = sphi 0, %s69
    %s70 = sphi 0, %s67
    %s71 = sphi 0, %s70
    %s87 = sphi 0, %s71
    %s93 = sphi 0, %s95
    %s96 = sphi 0, %s93
    %s97 = sphi 0, %s96
    %s113 = sphi 0, %s97
    %s119 = sphi 0, %s121
    %s122 = sphi 0, %s119
    %s123 = sphi 0, %s122
    %s139 = sphi 0, %s123
  $region4: #{wavelet_unpool.3} parent=0 // loop_header_branch
    %13 = sbr.rel (%p11) target = $region8
  $region5: #{wavelet_unpool.3} parent=0 // loop_body
    %s15 = ssub.s32 %s10, 1
    %s16 = ssub.s32 %s10, 2
    %s17 = sadd.s32 %s10, 1
    %s18 = ssub.s32 %s10, %s17
    %p19 = scmp.eq.s32.totalorder %s18, 0
    %s21 = sadd.s32 %s20, 1
    %s22 = scalar_select %p19, %s20, %s21
    %p25 = pneg %p19
    %p26 = scmp.eq.s32.totalorder %s10, 3
    %p27 = por %p25, %p26
    %p28 = scmp.ne.s32.totalorder %s20, %s23
    %p29 = scmp.eq.s32.totalorder %s10, 0
    %p30 = por %p28, %p29
    %p31 = scmp.ne.s32.totalorder %s20, %s23
    %p32 = scmp.eq.s32.totalorder %s15, 3
    %p33 = por %p31, %p32
    %p34 = scmp.ne.s32.totalorder %s23, %s24
    %p35 = scmp.eq.s32.totalorder %s15, 0
    %p36 = por %p34, %p35
    %p37 = scmp.ne.s32.totalorder %s23, %s24
    %p38 = scmp.eq.s32.totalorder %s16, 3
    %p39 = por %p37, %p38
    %p41 = scmp.ne.s32.totalorder %s24, %s40
    %p42 = scmp.eq.s32.totalorder %s16, 0
    %p43 = por %p41, %p42
    %s45 = sadd.s32 %s44, 1
    %p48 = scmp.eq.s32.totalorder %s10, 3
    %p49 = scmp.ne.s32.totalorder %s44, %s46
    %p50 = scmp.eq.s32.totalorder %s10, 0
    %p51 = por %p49, %p50
    %p52 = scmp.ne.s32.totalorder %s44, %s46
    %p53 = scmp.eq.s32.totalorder %s15, 3
    %p54 = por %p52, %p53
    %p55 = scmp.ne.s32.totalorder %s46, %s47
    %p56 = scmp.eq.s32.totalorder %s15, 0
    %p57 = por %p55, %p56
    %p58 = scmp.ne.s32.totalorder %s46, %s47
    %p59 = scmp.eq.s32.totalorder %s16, 3
    %p60 = por %p58, %p59
    %p62 = scmp.ne.s32.totalorder %s47, %s61
    %p63 = scmp.eq.s32.totalorder %s16, 0
    %p64 = por %p62, %p63
    %s65 = ssub.s32 %s10, %s17
    %p66 = scmp.eq.s32.totalorder %s65, 0
    %s68 = sadd.s32 %s67, 1
    %s69 = scalar_select %p66, %s67, %s68
    %p72 = pneg %p66
    %p73 = scmp.eq.s32.totalorder %s10, 3
    %p74 = por %p72, %p73
    %p75 = scmp.ne.s32.totalorder %s67, %s70
    %p76 = scmp.eq.s32.totalorder %s10, 0
    %p77 = por %p75, %p76
    %p78 = scmp.ne.s32.totalorder %s67, %s70
    %p79 = scmp.eq.s32.totalorder %s15, 3
    %p80 = por %p78, %p79
    %p81 = scmp.ne.s32.totalorder %s70, %s71
    %p82 = scmp.eq.s32.totalorder %s15, 0
    %p83 = por %p81, %p82
    %p84 = scmp.ne.s32.totalorder %s70, %s71
    %p85 = scmp.eq.s32.totalorder %s16, 3
    %p86 = por %p84, %p85
    %p88 = scmp.ne.s32.totalorder %s71, %s87
    %p89 = scmp.eq.s32.totalorder %s16, 0
    %p90 = por %p88, %p89
    %s91 = ssub.s32 %s10, %s17
    %p92 = scmp.eq.s32.totalorder %s91, 0
    %s94 = sadd.s32 %s93, 1
    %s95 = scalar_select %p92, %s93, %s94
    %p98 = pneg %p92
    %p99 = scmp.eq.s32.totalorder %s10, 3
    %p100 = por %p98, %p99
    %p101 = scmp.ne.s32.totalorder %s93, %s96
    %p102 = scmp.eq.s32.totalorder %s10, 0
    %p103 = por %p101, %p102
    %p104 = scmp.ne.s32.totalorder %s93, %s96
    %p105 = scmp.eq.s32.totalorder %s15, 3
    %p106 = por %p104, %p105
    %p107 = scmp.ne.s32.totalorder %s96, %s97
    %p108 = scmp.eq.s32.totalorder %s15, 0
    %p109 = por %p107, %p108
    %p110 = scmp.ne.s32.totalorder %s96, %s97
    %p111 = scmp.eq.s32.totalorder %s16, 3
    %p112 = por %p110, %p111
    %p114 = scmp.ne.s32.totalorder %s97, %s113
    %p115 = scmp.eq.s32.totalorder %s16, 0
    %p116 = por %p114, %p115
    %s117 = ssub.s32 %s10, %s17
    %p118 = scmp.eq.s32.totalorder %s117, 0
    %s120 = sadd.s32 %s119, 1
    %s121 = scalar_select %p118, %s119, %s120
    %p124 = pneg %p118
    %p125 = scmp.eq.s32.totalorder %s10, 3
    %p126 = por %p124, %p125
    %p127 = scmp.ne.s32.totalorder %s119, %s122
    %p128 = scmp.eq.s32.totalorder %s10, 0
    %p129 = por %p127, %p128
    %p130 = scmp.ne.s32.totalorder %s119, %s122
    %p131 = scmp.eq.s32.totalorder %s15, 3
    %p132 = por %p130, %p131
    %p133 = scmp.ne.s32.totalorder %s122, %s123
    %p134 = scmp.eq.s32.totalorder %s15, 0
    %p135 = por %p133, %p134
    %p136 = scmp.ne.s32.totalorder %s122, %s123
    %p137 = scmp.eq.s32.totalorder %s16, 3
    %p138 = por %p136, %p137
    %p140 = scmp.ne.s32.totalorder %s123, %s139
    %p141 = scmp.eq.s32.totalorder %s16, 0
    %p142 = por %p140, %p141
    %p143 = scmp.le.s32.totalorder 1, %s10
    %p144 = scmp.lt.s32.totalorder %s10, 5
    %p145 = pnand %p143, %p144
    %p146 = pneg %p145
    // Predicated region
    $region9: #{wavelet_unpool.3} parent=5 // pred_check
      _
    $region10: #{wavelet_unpool.3} parent=5 // pred_check_branch
      %148 = sbr.rel (%p145) target = $region12
    $region11: #{wavelet_unpool.3} parent=5 // pred_region
      %s149 = ssub.s32 %s10, 1
      // Predicated region
      $region13: #{wavelet_unpool.3} parent=11 // pred_check
        %p150 = pneg %p57
      $region14: #{wavelet_unpool.3} parent=11 // pred_check_branch
        %152 = sbr.rel (%p150) target = $region16
      $region15: #{wavelet_unpool.3} parent=11 // pred_region
        _
      $region16: #{wavelet_unpool.3} parent=11 // pred_fallthru
        _
    $region12: #{wavelet_unpool.3} parent=5 // pred_fallthru
      _
    %p153 = scmp.lt.s32.totalorder %s10, 4
    // Predicated region
    $region17: #{wavelet_unpool.3} parent=5 // pred_check
      %p154 = pneg %p153
    $region18: #{wavelet_unpool.3} parent=5 // pred_check_branch
      %156 = sbr.rel (%p154) target = $region20
    $region19: #{wavelet_unpool.3} parent=5 // pred_region
      // Predicated region
      $region21: #{wavelet_unpool.3} parent=19 // pred_check
        %p157 = pneg %p30
      $region22: #{wavelet_unpool.3} parent=19 // pred_check_branch
        %159 = sbr.rel (%p157) target = $region24
      $region23: #{wavelet_unpool.3} parent=19 // pred_region
        %p160 = scmp.lt.s32.totalorder %s10, 3
        %s161 = scalar_select %p160, %s10, 3
        %s162 = smul.addr %s161, 4
        %s163 = smul.addr %s162, 8
        %s164 = scalar_lea.vmem %s0, %s163
      $region24: #{wavelet_unpool.3} parent=19 // pred_fallthru
        _
      // Predicated region
      $region25: #{wavelet_unpool.3} parent=19 // pred_check
        %p165 = pneg %p77
      $region26: #{wavelet_unpool.3} parent=19 // pred_check_branch
        %167 = sbr.rel (%p165) target = $region28
      $region27: #{wavelet_unpool.3} parent=19 // pred_region
        %p168 = scmp.lt.s32.totalorder %s10, 3
        %s169 = scalar_select %p168, %s10, 3
        %s170 = scalar_lea.vmem %s2, %s169
      $region28: #{wavelet_unpool.3} parent=19 // pred_fallthru
        _
      // Predicated region
      $region29: #{wavelet_unpool.3} parent=19 // pred_check
        %p171 = pneg %p103
      $region30: #{wavelet_unpool.3} parent=19 // pred_check_branch
        %173 = sbr.rel (%p171) target = $region32
      $region31: #{wavelet_unpool.3} parent=19 // pred_region
        %p174 = scmp.lt.s32.totalorder %s10, 3
        %s175 = scalar_select %p174, %s10, 3
        %s176 = scalar_lea.vmem %s3, %s175
      $region32: #{wavelet_unpool.3} parent=19 // pred_fallthru
        _
    $region20: #{wavelet_unpool.3} parent=5 // pred_fallthru
      _
    %p177 = scmp.le.s32.totalorder 1, %s10
    %p178 = scmp.lt.s32.totalorder %s10, 5
    %p179 = pnand %p177, %p178
    %p180 = pneg %p179
    // Predicated region
    $region33: #{wavelet_unpool.3} parent=5 // pred_check
      _
    $region34: #{wavelet_unpool.3} parent=5 // pred_check_branch
      %182 = sbr.rel (%p179) target = $region36
    $region35: #{wavelet_unpool.3} parent=5 // pred_region
      %s183 = ssub.s32 %s10, 1
      %p184 = scmp.lt.s32.totalorder %s15, 3
      %s185 = scalar_select %p184, %s15, 3
      %s186 = smul.addr %s185, 4
      %s187 = smul.addr %s186, 8
      %s188 = scalar_lea.vmem %s0, %s187
      %p189 = pneg %p36
      %p190 = pneg %p33
      %p191 = pneg %p57
      %p192 = pneg %p54
      %p193 = scmp.lt.s32.totalorder %s15, 3
      %s194 = scalar_select %p193, %s15, 3
      %s195 = scalar_lea.vmem %s2, %s194
      %p196 = pneg %p83
      %p197 = pneg %p80
      %p198 = scmp.lt.s32.totalorder %s15, 3
      %s199 = scalar_select %p198, %s15, 3
      %s200 = scalar_lea.vmem %s3, %s199
      %p201 = pneg %p109
      %p202 = pneg %p106
      %p203 = pneg %p135
      %p204 = pneg %p132
      %p205 = scmp.lt.s32.totalorder %s15, 3
      %s206 = scalar_select %p205, %s15, 3
      %s207 = smul.addr %s206, 8
      %s208 = scalar_lea.vmem %s4, %s207
      %p209 = scmp.lt.s32.totalorder %s15, 3
      %s210 = scalar_select %p209, %s15, 3
      %s211 = smul.addr %s210, 4
      %s212 = smul.addr %s211, 8
      %s213 = scalar_lea.vmem %s0, %s212
      %p214 = scmp.lt.s32.totalorder %s15, 3
      %s215 = scalar_select %p214, %s15, 3
      %s216 = scalar_lea.vmem %s2, %s215
      %p217 = scmp.lt.s32.totalorder %s15, 3
      %s218 = scalar_select %p217, %s15, 3
      %s219 = scalar_lea.vmem %s3, %s218
      %p220 = scmp.lt.s32.totalorder %s15, 3
      %s221 = scalar_select %p220, %s15, 3
      %s222 = smul.addr %s221, 8
      %s223 = scalar_lea.vmem %s4, %s222
      %v224 = vld [vmem:[%s213] sm:$0xff]
      %v225 = vld [vmem:[%s1] sm:$0xff]
      %v226 = vld [vmem:[%s1 + $0x8] sm:$0xff]
      %v227 = vld [vmem:[%s1 + $0x10] sm:$0xff]
      %v228 = vld [vmem:[%s1 + $0x18] sm:$0xff]
      %s229 = scalar_lea.vmem %s213, 8
      %v230 = vld [vmem:[%s229] sm:$0xff]
      %s231 = scalar_lea.vmem %s1, 32
      %v232 = vld [vmem:[%s231] sm:$0xff]
      %v233 = vld [vmem:[%s231 + $0x8] sm:$0xff]
      %v234 = vld [vmem:[%s231 + $0x10] sm:$0xff]
      %v235 = vld [vmem:[%s231 + $0x18] sm:$0xff]
      %vm236 = vcmask 261120
      %v238 = vsel %vm236, %v230, 0
      %240 = vmatprep.subr.mxu0 0.0
      %241 = vmatpush1.msra.mxu0 0.0
      %242 = vmatprep.subr.mxu0 0.0
      %243 = vmatpush1.msra.mxu0 0.0
      %244 = vmatprep.subr.mxu0 0.0
      %245 = vmatpush1.msra.mxu0 0.0
      %246 = vmatprep.subr.mxu0 0.0
      %247 = vmatpush1.msra.mxu0 0.0
      %248 = vmatprep.subr.mxu0 0.0
      %249 = vmatpush1.msra.mxu0 0.0
      %250 = vmatprep.subr.mxu0 0.0
      %251 = vmatpush1.msra.mxu0 0.0
      %252 = vmatprep.subr.mxu0 0.0
      %253 = vmatpush1.msra.mxu0 0.0
      %254 = vmatprep.subr.mxu0 0.0
      %255 = vmatpush1.msra.mxu0 0.0
      %256 = vmatprep.subr.mxu0 0.0
      %257 = vmatpush1.msra.mxu0 0.0
      %258 = vmatprep.subr.mxu0 0.0
      %259 = vmatpush1.msra.mxu0 0.0
      %260 = vmatprep.subr.mxu0 0.0
      %261 = vmatpush1.msra.mxu0 0.0
      %262 = vmatprep.subr.mxu0 0.0
      %263 = vmatpush1.msra.mxu0 0.0
      %264 = vmatprep.subr.mxu0 0.0
      %v265 = vand.u32 %v235, 4294901760
      %266 = vmatpush1.msra.mxu0 %v265
      %267 = vmatprep.subr.mxu0 0.0
      %v268 = vand.u32 %v234, 4294901760
      %269 = vmatpush1.msra.mxu0 %v268
      %270 = vmatprep.subr.mxu0 0.0
      %v271 = vand.u32 %v233, 4294901760
      %272 = vmatpush1.msra.mxu0 %v271
      %273 = vmatprep.subr.mxu0 0.0
      %v274 = vand.u32 %v232, 4294901760
      %275 = vmatpush1.msra.mxu0 %v274
      %276 = vmatprep.subr.mxu0 0.0
      %277 = vmatpush2.msra.mxu0 0.0
      %278 = vmatprep.subr.mxu0 0.0
      %279 = vmatpush2.msra.mxu0 0.0
      %280 = vmatprep.subr.mxu0 0.0
      %281 = vmatpush2.msra.mxu0 0.0
      %282 = vmatprep.subr.mxu0 0.0
      %283 = vmatpush2.msra.mxu0 0.0
      %284 = vmatprep.subr.mxu0 0.0
      %285 = vmatpush2.msra.mxu0 0.0
      %286 = vmatprep.subr.mxu0 0.0
      %287 = vmatpush2.msra.mxu0 0.0
      %288 = vmatprep.subr.mxu0 0.0
      %289 = vmatpush2.msra.mxu0 0.0
      %290 = vmatprep.subr.mxu0 0.0
      %291 = vmatpush2.msra.mxu0 0.0
      %292 = vmatprep.subr.mxu0 0.0
      %293 = vmatpush2.msra.mxu0 0.0
      %294 = vmatprep.subr.mxu0 0.0
      %295 = vmatpush2.msra.mxu0 0.0
      %296 = vmatprep.subr.mxu0 0.0
      %297 = vmatpush2.msra.mxu0 0.0
      %298 = vmatprep.subr.mxu0 0.0
      %299 = vmatpush2.msra.mxu0 0.0
      %300 = vmatprep.subr.mxu0 0.0
      %301 = vmatpush2.msra.mxu0 0.0
      %302 = vmatprep.subr.mxu0 0.0
      %303 = vmatpush2.msra.mxu0 0.0
      %304 = vmatprep.subr.mxu0 0.0
      %305 = vmatpush2.msra.mxu0 0.0
      %306 = vmatprep.subr.mxu0 0.0
      %307 = vmatpush2.msra.mxu0 0.0
      %308 = vmatprep.mubr.f32.mxu0 0.0
      %v309 = vand.u32 %v238, 4294901760
      %v310 = vsub.f32 %v238, %v309
      %v311 = vand.u32 %v310, 4294901760
      %v312 = vsub.f32 %v310, %v311
      %v313 = vand.u32 %v312, 4294901760
      %314 = vmatmul.mubr.f32.gmra.mxu0 %v313
      %v315 = vpop.f32.mrf.mxu0
      %v316 = vadd.f32 0.0, %v315
      %v317 = vpop.f32.mrf.mxu0
      %318 = vdwg.mxu0
      %319 = vmatprep.subr.mxu0 0.0
      %320 = vmatpush1.msra.mxu0 0.0
      %321 = vmatprep.subr.mxu0 0.0
      %322 = vmatpush1.msra.mxu0 0.0
      %323 = vmatprep.subr.mxu0 0.0
      %324 = vmatpush1.msra.mxu0 0.0
      %325 = vmatprep.subr.mxu0 0.0
      %326 = vmatpush1.msra.mxu0 0.0
      %327 = vmatprep.subr.mxu0 0.0
      %328 = vmatpush1.msra.mxu0 0.0
      %329 = vmatprep.subr.mxu0 0.0
      %330 = vmatpush1.msra.mxu0 0.0
      %331 = vmatprep.subr.mxu0 0.0
      %332 = vmatpush1.msra.mxu0 0.0
      %333 = vmatprep.subr.mxu0 0.0
      %334 = vmatpush1.msra.mxu0 0.0
      %335 = vmatprep.subr.mxu0 0.0
      %336 = vmatpush1.msra.mxu0 0.0
      %337 = vmatprep.subr.mxu0 0.0
      %338 = vmatpush1.msra.mxu0 0.0
      %339 = vmatprep.subr.mxu0 0.0
      %340 = vmatpush1.msra.mxu0 0.0
      %341 = vmatprep.subr.mxu0 0.0
      %342 = vmatpush1.msra.mxu0 0.0
      %343 = vmatprep.subr.mxu0 0.0
      %v344 = vand.u32 %v235, 4294901760
      %v345 = vsub.f32 %v235, %v344
      %v346 = vand.u32 %v345, 4294901760
      %v347 = vsub.f32 %v345, %v346
      %v348 = vand.u32 %v347, 4294901760
      %349 = vmatpush1.msra.mxu0 %v348
      %350 = vmatprep.subr.mxu0 0.0
      %v351 = vand.u32 %v234, 4294901760
      %v352 = vsub.f32 %v234, %v351
      %v353 = vand.u32 %v352, 4294901760
      %v354 = vsub.f32 %v352, %v353
      %v355 = vand.u32 %v354, 4294901760
      %356 = vmatpush1.msra.mxu0 %v355
      %357 = vmatprep.subr.mxu0 0.0
      %v358 = vand.u32 %v233, 4294901760
      %v359 = vsub.f32 %v233, %v358
      %v360 = vand.u32 %v359, 4294901760
      %v361 = vsub.f32 %v359, %v360
      %v362 = vand.u32 %v361, 4294901760
      %363 = vmatpush1.msra.mxu0 %v362
      %364 = vmatprep.subr.mxu0 0.0
      %v365 = vand.u32 %v232, 4294901760
      %v366 = vsub.f32 %v232, %v365
      %v367 = vand.u32 %v366, 4294901760
      %v368 = vsub.f32 %v366, %v367
      %v369 = vand.u32 %v368, 4294901760
      %370 = vmatpush1.msra.mxu0 %v369
      %371 = vmatprep.subr.mxu0 0.0
      %372 = vmatpush2.msra.mxu0 0.0
      %373 = vmatprep.subr.mxu0 0.0
      %374 = vmatpush2.msra.mxu0 0.0
      %375 = vmatprep.subr.mxu0 0.0
      %376 = vmatpush2.msra.mxu0 0.0
      %377 = vmatprep.subr.mxu0 0.0
      %378 = vmatpush2.msra.mxu0 0.0
      %379 = vmatprep.subr.mxu0 0.0
      %380 = vmatpush2.msra.mxu0 0.0
      %381 = vmatprep.subr.mxu0 0.0
      %382 = vmatpush2.msra.mxu0 0.0
      %383 = vmatprep.subr.mxu0 0.0
      %384 = vmatpush2.msra.mxu0 0.0
      %385 = vmatprep.subr.mxu0 0.0
      %386 = vmatpush2.msra.mxu0 0.0
      %387 = vmatprep.subr.mxu0 0.0
      %388 = vmatpush2.msra.mxu0 0.0
      %389 = vmatprep.subr.mxu0 0.0
      %390 = vmatpush2.msra.mxu0 0.0
      %391 = vmatprep.subr.mxu0 0.0
      %392 = vmatpush2.msra.mxu0 0.0
      %393 = vmatprep.subr.mxu0 0.0
      %394 = vmatpush2.msra.mxu0 0.0
      %395 = vmatprep.subr.mxu0 0.0
      %396 = vmatpush2.msra.mxu0 0.0
      %397 = vmatprep.subr.mxu0 0.0
      %398 = vmatpush2.msra.mxu0 0.0
      %399 = vmatprep.subr.mxu0 0.0
      %400 = vmatpush2.msra.mxu0 0.0
      %401 = vmatprep.subr.mxu0 0.0
      %402 = vmatpush2.msra.mxu0 0.0
      %403 = vmatprep.mubr.f32.mxu0 0.0
      %v404 = vand.u32 %v238, 4294901760
      %405 = vmatmul.mubr.f32.gmra.mxu0 %v404
      %v406 = vpop.f32.mrf.mxu0
      %v407 = vadd.f32 %v316, %v406
      %v408 = vpop.f32.mrf.mxu0
      %409 = vdwg.mxu0
      %410 = vmatprep.subr.mxu0 0.0
      %411 = vmatpush1.msra.mxu0 0.0
      %412 = vmatprep.subr.mxu0 0.0
      %413 = vmatpush1.msra.mxu0 0.0
      %414 = vmatprep.subr.mxu0 0.0
      %415 = vmatpush1.msra.mxu0 0.0
      %416 = vmatprep.subr.mxu0 0.0
      %417 = vmatpush1.msra.mxu0 0.0
      %418 = vmatprep.subr.mxu0 0.0
      %419 = vmatpush1.msra.mxu0 0.0
      %420 = vmatprep.subr.mxu0 0.0
      %421 = vmatpush1.msra.mxu0 0.0
      %422 = vmatprep.subr.mxu0 0.0
      %423 = vmatpush1.msra.mxu0 0.0
      %424 = vmatprep.subr.mxu0 0.0
      %425 = vmatpush1.msra.mxu0 0.0
      %426 = vmatprep.subr.mxu0 0.0
      %427 = vmatpush1.msra.mxu0 0.0
      %428 = vmatprep.subr.mxu0 0.0
      %429 = vmatpush1.msra.mxu0 0.0
      %430 = vmatprep.subr.mxu0 0.0
      %431 = vmatpush1.msra.mxu0 0.0
      %432 = vmatprep.subr.mxu0 0.0
      %433 = vmatpush1.msra.mxu0 0.0
      %434 = vmatprep.subr.mxu0 0.0
      %v435 = vand.u32 %v235, 4294901760
      %v436 = vsub.f32 %v235, %v435
      %437 = vmatpush1.msra.mxu0 %v436
      %438 = vmatprep.subr.mxu0 0.0
      %v439 = vand.u32 %v234, 4294901760
      %v440 = vsub.f32 %v234, %v439
      %441 = vmatpush1.msra.mxu0 %v440
      %442 = vmatprep.subr.mxu0 0.0
      %v443 = vand.u32 %v233, 4294901760
      %v444 = vsub.f32 %v233, %v443
      %445 = vmatpush1.msra.mxu0 %v444
      %446 = vmatprep.subr.mxu0 0.0
      %v447 = vand.u32 %v232, 4294901760
      %v448 = vsub.f32 %v232, %v447
      %449 = vmatpush1.msra.mxu0 %v448
      %450 = vmatprep.subr.mxu0 0.0
      %451 = vmatpush2.msra.mxu0 0.0
      %452 = vmatprep.subr.mxu0 0.0
      %453 = vmatpush2.msra.mxu0 0.0
      %454 = vmatprep.subr.mxu0 0.0
      %455 = vmatpush2.msra.mxu0 0.0
      %456 = vmatprep.subr.mxu0 0.0
      %457 = vmatpush2.msra.mxu0 0.0
      %458 = vmatprep.subr.mxu0 0.0
      %459 = vmatpush2.msra.mxu0 0.0
      %460 = vmatprep.subr.mxu0 0.0
      %461 = vmatpush2.msra.mxu0 0.0
      %462 = vmatprep.subr.mxu0 0.0
      %463 = vmatpush2.msra.mxu0 0.0
      %464 = vmatprep.subr.mxu0 0.0
      %465 = vmatpush2.msra.mxu0 0.0
      %466 = vmatprep.subr.mxu0 0.0
      %467 = vmatpush2.msra.mxu0 0.0
      %468 = vmatprep.subr.mxu0 0.0
      %469 = vmatpush2.msra.mxu0 0.0
      %470 = vmatprep.subr.mxu0 0.0
      %471 = vmatpush2.msra.mxu0 0.0
      %472 = vmatprep.subr.mxu0 0.0
      %473 = vmatpush2.msra.mxu0 0.0
      %474 = vmatprep.subr.mxu0 0.0
      %475 = vmatpush2.msra.mxu0 0.0
      %476 = vmatprep.subr.mxu0 0.0
      %477 = vmatpush2.msra.mxu0 0.0
      %478 = vmatprep.subr.mxu0 0.0
      %479 = vmatpush2.msra.mxu0 0.0
      %480 = vmatprep.subr.mxu0 0.0
      %481 = vmatpush2.msra.mxu0 0.0
      %482 = vmatprep.mubr.f32.mxu0 0.0
      %v483 = vand.u32 %v238, 4294901760
      %v484 = vsub.f32 %v238, %v483
      %485 = vmatmul.mubr.f32.gmra.mxu0 %v484
      %v486 = vpop.f32.mrf.mxu0
      %v487 = vadd.f32 %v407, %v486
      %v488 = vpop.f32.mrf.mxu0
      %489 = vdwg.mxu0
      %490 = vmatprep.subr.mxu0 0.0
      %491 = vmatpush1.msra.mxu0 0.0
      %492 = vmatprep.subr.mxu0 0.0
      %493 = vmatpush1.msra.mxu0 0.0
      %494 = vmatprep.subr.mxu0 0.0
      %495 = vmatpush1.msra.mxu0 0.0
      %496 = vmatprep.subr.mxu0 0.0
      %497 = vmatpush1.msra.mxu0 0.0
      %498 = vmatprep.subr.mxu0 0.0
      %499 = vmatpush1.msra.mxu0 0.0
      %500 = vmatprep.subr.mxu0 0.0
      %501 = vmatpush1.msra.mxu0 0.0
      %502 = vmatprep.subr.mxu0 0.0
      %503 = vmatpush1.msra.mxu0 0.0
      %504 = vmatprep.subr.mxu0 0.0
      %505 = vmatpush1.msra.mxu0 0.0
      %506 = vmatprep.subr.mxu0 0.0
      %507 = vmatpush1.msra.mxu0 0.0
      %508 = vmatprep.subr.mxu0 0.0
      %509 = vmatpush1.msra.mxu0 0.0
      %510 = vmatprep.subr.mxu0 0.0
      %511 = vmatpush1.msra.mxu0 0.0
      %512 = vmatprep.subr.mxu0 0.0
      %513 = vmatpush1.msra.mxu0 0.0
      %514 = vmatprep.subr.mxu0 0.0
      %v515 = vand.u32 %v235, 4294901760
      %516 = vmatpush1.msra.mxu0 %v515
      %517 = vmatprep.subr.mxu0 0.0
      %v518 = vand.u32 %v234, 4294901760
      %519 = vmatpush1.msra.mxu0 %v518
      %520 = vmatprep.subr.mxu0 0.0
      %v521 = vand.u32 %v233, 4294901760
      %522 = vmatpush1.msra.mxu0 %v521
      %523 = vmatprep.subr.mxu0 0.0
      %v524 = vand.u32 %v232, 4294901760
      %525 = vmatpush1.msra.mxu0 %v524
      %526 = vmatprep.subr.mxu0 0.0
      %527 = vmatpush2.msra.mxu0 0.0
      %528 = vmatprep.subr.mxu0 0.0
      %529 = vmatpush2.msra.mxu0 0.0
      %530 = vmatprep.subr.mxu0 0.0
      %531 = vmatpush2.msra.mxu0 0.0
      %532 = vmatprep.subr.mxu0 0.0
      %533 = vmatpush2.msra.mxu0 0.0
      %534 = vmatprep.subr.mxu0 0.0
      %535 = vmatpush2.msra.mxu0 0.0
      %536 = vmatprep.subr.mxu0 0.0
      %537 = vmatpush2.msra.mxu0 0.0
      %538 = vmatprep.subr.mxu0 0.0
      %539 = vmatpush2.msra.mxu0 0.0
      %540 = vmatprep.subr.mxu0 0.0
      %541 = vmatpush2.msra.mxu0 0.0
      %542 = vmatprep.subr.mxu0 0.0
      %543 = vmatpush2.msra.mxu0 0.0
      %544 = vmatprep.subr.mxu0 0.0
      %545 = vmatpush2.msra.mxu0 0.0
      %546 = vmatprep.subr.mxu0 0.0
      %547 = vmatpush2.msra.mxu0 0.0
      %548 = vmatprep.subr.mxu0 0.0
      %549 = vmatpush2.msra.mxu0 0.0
      %550 = vmatprep.subr.mxu0 0.0
      %551 = vmatpush2.msra.mxu0 0.0
      %552 = vmatprep.subr.mxu0 0.0
      %553 = vmatpush2.msra.mxu0 0.0
      %554 = vmatprep.subr.mxu0 0.0
      %555 = vmatpush2.msra.mxu0 0.0
      %556 = vmatprep.subr.mxu0 0.0
      %557 = vmatpush2.msra.mxu0 0.0
      %558 = vmatprep.mubr.f32.mxu0 0.0
      %v559 = vand.u32 %v238, 4294901760
      %v560 = vsub.f32 %v238, %v559
      %v561 = vand.u32 %v560, 4294901760
      %562 = vmatmul.mubr.f32.gmra.mxu0 %v561
      %v563 = vpop.f32.mrf.mxu0
      %v564 = vadd.f32 %v487, %v563
      %v565 = vpop.f32.mrf.mxu0
      %566 = vdwg.mxu0
      %567 = vmatprep.subr.mxu0 0.0
      %568 = vmatpush1.msra.mxu0 0.0
      %569 = vmatprep.subr.mxu0 0.0
      %570 = vmatpush1.msra.mxu0 0.0
      %571 = vmatprep.subr.mxu0 0.0
      %572 = vmatpush1.msra.mxu0 0.0
      %573 = vmatprep.subr.mxu0 0.0
      %574 = vmatpush1.msra.mxu0 0.0
      %575 = vmatprep.subr.mxu0 0.0
      %576 = vmatpush1.msra.mxu0 0.0
      %577 = vmatprep.subr.mxu0 0.0
      %578 = vmatpush1.msra.mxu0 0.0
      %579 = vmatprep.subr.mxu0 0.0
      %580 = vmatpush1.msra.mxu0 0.0
      %581 = vmatprep.subr.mxu0 0.0
      %582 = vmatpush1.msra.mxu0 0.0
      %583 = vmatprep.subr.mxu0 0.0
      %584 = vmatpush1.msra.mxu0 0.0
      %585 = vmatprep.subr.mxu0 0.0
      %586 = vmatpush1.msra.mxu0 0.0
      %587 = vmatprep.subr.mxu0 0.0
      %588 = vmatpush1.msra.mxu0 0.0
      %589 = vmatprep.subr.mxu0 0.0
      %590 = vmatpush1.msra.mxu0 0.0
      %591 = vmatprep.subr.mxu0 0.0
      %v592 = vand.u32 %v235, 4294901760
      %v593 = vsub.f32 %v235, %v592
      %v594 = vand.u32 %v593, 4294901760
      %595 = vmatpush1.msra.mxu0 %v594
      %596 = vmatprep.subr.mxu0 0.0
      %v597 = vand.u32 %v234, 4294901760
      %v598 = vsub.f32 %v234, %v597
      %v599 = vand.u32 %v598, 4294901760
      %600 = vmatpush1.msra.mxu0 %v599
      %601 = vmatprep.subr.mxu0 0.0
      %v602 = vand.u32 %v233, 4294901760
      %v603 = vsub.f32 %v233, %v602
      %v604 = vand.u32 %v603, 4294901760
      %605 = vmatpush1.msra.mxu0 %v604
      %606 = vmatprep.subr.mxu0 0.0
      %v607 = vand.u32 %v232, 4294901760
      %v608 = vsub.f32 %v232, %v607
      %v609 = vand.u32 %v608, 4294901760
      %610 = vmatpush1.msra.mxu0 %v609
      %611 = vmatprep.subr.mxu0 0.0
      %612 = vmatpush2.msra.mxu0 0.0
      %613 = vmatprep.subr.mxu0 0.0
      %614 = vmatpush2.msra.mxu0 0.0
      %615 = vmatprep.subr.mxu0 0.0
      %616 = vmatpush2.msra.mxu0 0.0
      %617 = vmatprep.subr.mxu0 0.0
      %618 = vmatpush2.msra.mxu0 0.0
      %619 = vmatprep.subr.mxu0 0.0
      %620 = vmatpush2.msra.mxu0 0.0
      %621 = vmatprep.subr.mxu0 0.0
      %622 = vmatpush2.msra.mxu0 0.0
      %623 = vmatprep.subr.mxu0 0.0
      %624 = vmatpush2.msra.mxu0 0.0
      %625 = vmatprep.subr.mxu0 0.0
      %626 = vmatpush2.msra.mxu0 0.0
      %627 = vmatprep.subr.mxu0 0.0
      %628 = vmatpush2.msra.mxu0 0.0
      %629 = vmatprep.subr.mxu0 0.0
      %630 = vmatpush2.msra.mxu0 0.0
      %631 = vmatprep.subr.mxu0 0.0
      %632 = vmatpush2.msra.mxu0 0.0
      %633 = vmatprep.subr.mxu0 0.0
      %634 = vmatpush2.msra.mxu0 0.0
      %635 = vmatprep.subr.mxu0 0.0
      %636 = vmatpush2.msra.mxu0 0.0
      %637 = vmatprep.subr.mxu0 0.0
      %638 = vmatpush2.msra.mxu0 0.0
      %639 = vmatprep.subr.mxu0 0.0
      %640 = vmatpush2.msra.mxu0 0.0
      %641 = vmatprep.subr.mxu0 0.0
      %642 = vmatpush2.msra.mxu0 0.0
      %643 = vmatprep.mubr.f32.mxu0 0.0
      %v644 = vand.u32 %v238, 4294901760
      %645 = vmatmul.mubr.f32.gmra.mxu0 %v644
      %v646 = vpop.f32.mrf.mxu0
      %v647 = vadd.f32 %v564, %v646
      %v648 = vpop.f32.mrf.mxu0
      %649 = vdwg.mxu0
      %650 = vmatprep.subr.mxu0 0.0
      %651 = vmatpush1.msra.mxu0 0.0
      %652 = vmatprep.subr.mxu0 0.0
      %653 = vmatpush1.msra.mxu0 0.0
      %654 = vmatprep.subr.mxu0 0.0
      %655 = vmatpush1.msra.mxu0 0.0
      %656 = vmatprep.subr.mxu0 0.0
      %657 = vmatpush1.msra.mxu0 0.0
      %658 = vmatprep.subr.mxu0 0.0
      %659 = vmatpush1.msra.mxu0 0.0
      %660 = vmatprep.subr.mxu0 0.0
      %661 = vmatpush1.msra.mxu0 0.0
      %662 = vmatprep.subr.mxu0 0.0
      %663 = vmatpush1.msra.mxu0 0.0
      %664 = vmatprep.subr.mxu0 0.0
      %665 = vmatpush1.msra.mxu0 0.0
      %666 = vmatprep.subr.mxu0 0.0
      %667 = vmatpush1.msra.mxu0 0.0
      %668 = vmatprep.subr.mxu0 0.0
      %669 = vmatpush1.msra.mxu0 0.0
      %670 = vmatprep.subr.mxu0 0.0
      %671 = vmatpush1.msra.mxu0 0.0
      %672 = vmatprep.subr.mxu0 0.0
      %673 = vmatpush1.msra.mxu0 0.0
      %674 = vmatprep.subr.mxu0 0.0
      %v675 = vand.u32 %v235, 4294901760
      %676 = vmatpush1.msra.mxu0 %v675
      %677 = vmatprep.subr.mxu0 0.0
      %v678 = vand.u32 %v234, 4294901760
      %679 = vmatpush1.msra.mxu0 %v678
      %680 = vmatprep.subr.mxu0 0.0
      %v681 = vand.u32 %v233, 4294901760
      %682 = vmatpush1.msra.mxu0 %v681
      %683 = vmatprep.subr.mxu0 0.0
      %v684 = vand.u32 %v232, 4294901760
      %685 = vmatpush1.msra.mxu0 %v684
      %686 = vmatprep.subr.mxu0 0.0
      %687 = vmatpush2.msra.mxu0 0.0
      %688 = vmatprep.subr.mxu0 0.0
      %689 = vmatpush2.msra.mxu0 0.0
      %690 = vmatprep.subr.mxu0 0.0
      %691 = vmatpush2.msra.mxu0 0.0
      %692 = vmatprep.subr.mxu0 0.0
      %693 = vmatpush2.msra.mxu0 0.0
      %694 = vmatprep.subr.mxu0 0.0
      %695 = vmatpush2.msra.mxu0 0.0
      %696 = vmatprep.subr.mxu0 0.0
      %697 = vmatpush2.msra.mxu0 0.0
      %698 = vmatprep.subr.mxu0 0.0
      %699 = vmatpush2.msra.mxu0 0.0
      %700 = vmatprep.subr.mxu0 0.0
      %701 = vmatpush2.msra.mxu0 0.0
      %702 = vmatprep.subr.mxu0 0.0
      %703 = vmatpush2.msra.mxu0 0.0
      %704 = vmatprep.subr.mxu0 0.0
      %705 = vmatpush2.msra.mxu0 0.0
      %706 = vmatprep.subr.mxu0 0.0
      %707 = vmatpush2.msra.mxu0 0.0
      %708 = vmatprep.subr.mxu0 0.0
      %709 = vmatpush2.msra.mxu0 0.0
      %710 = vmatprep.subr.mxu0 0.0
      %711 = vmatpush2.msra.mxu0 0.0
      %712 = vmatprep.subr.mxu0 0.0
      %713 = vmatpush2.msra.mxu0 0.0
      %714 = vmatprep.subr.mxu0 0.0
      %715 = vmatpush2.msra.mxu0 0.0
      %716 = vmatprep.subr.mxu0 0.0
      %717 = vmatpush2.msra.mxu0 0.0
      %718 = vmatprep.mubr.f32.mxu0 0.0
      %v719 = vand.u32 %v238, 4294901760
      %720 = vmatmul.mubr.f32.gmra.mxu0 %v719
      %v721 = vpop.f32.mrf.mxu0
      %v722 = vadd.f32 %v647, %v721
      %v723 = vpop.f32.mrf.mxu0
      %724 = vdwg.mxu0
      %v726 = vsel %vm236, %v224, 0
      %728 = vmatprep.subr.mxu0 0.0
      %729 = vmatpush1.msra.mxu0 0.0
      %730 = vmatprep.subr.mxu0 0.0
      %731 = vmatpush1.msra.mxu0 0.0
      %732 = vmatprep.subr.mxu0 0.0
      %733 = vmatpush1.msra.mxu0 0.0
      %734 = vmatprep.subr.mxu0 0.0
      %735 = vmatpush1.msra.mxu0 0.0
      %736 = vmatprep.subr.mxu0 0.0
      %737 = vmatpush1.msra.mxu0 0.0
      %738 = vmatprep.subr.mxu0 0.0
      %739 = vmatpush1.msra.mxu0 0.0
      %740 = vmatprep.subr.mxu0 0.0
      %741 = vmatpush1.msra.mxu0 0.0
      %742 = vmatprep.subr.mxu0 0.0
      %743 = vmatpush1.msra.mxu0 0.0
      %744 = vmatprep.subr.mxu0 0.0
      %745 = vmatpush1.msra.mxu0 0.0
      %746 = vmatprep.subr.mxu0 0.0
      %747 = vmatpush1.msra.mxu0 0.0
      %748 = vmatprep.subr.mxu0 0.0
      %749 = vmatpush1.msra.mxu0 0.0
      %750 = vmatprep.subr.mxu0 0.0
      %751 = vmatpush1.msra.mxu0 0.0
      %752 = vmatprep.subr.mxu0 0.0
      %v753 = vand.u32 %v228, 4294901760
      %754 = vmatpush1.msra.mxu0 %v753
      %755 = vmatprep.subr.mxu0 0.0
      %v756 = vand.u32 %v227, 4294901760
      %757 = vmatpush1.msra.mxu0 %v756
      %758 = vmatprep.subr.mxu0 0.0
      %v759 = vand.u32 %v226, 4294901760
      %760 = vmatpush1.msra.mxu0 %v759
      %761 = vmatprep.subr.mxu0 0.0
      %v762 = vand.u32 %v225, 4294901760
      %763 = vmatpush1.msra.mxu0 %v762
      %764 = vmatprep.subr.mxu0 0.0
      %765 = vmatpush2.msra.mxu0 0.0
      %766 = vmatprep.subr.mxu0 0.0
      %767 = vmatpush2.msra.mxu0 0.0
      %768 = vmatprep.subr.mxu0 0.0
      %769 = vmatpush2.msra.mxu0 0.0
      %770 = vmatprep.subr.mxu0 0.0
      %771 = vmatpush2.msra.mxu0 0.0
      %772 = vmatprep.subr.mxu0 0.0
      %773 = vmatpush2.msra.mxu0 0.0
      %774 = vmatprep.subr.mxu0 0.0
      %775 = vmatpush2.msra.mxu0 0.0
      %776 = vmatprep.subr.mxu0 0.0
      %777 = vmatpush2.msra.mxu0 0.0
      %778 = vmatprep.subr.mxu0 0.0
      %779 = vmatpush2.msra.mxu0 0.0
      %780 = vmatprep.subr.mxu0 0.0
      %781 = vmatpush2.msra.mxu0 0.0
      %782 = vmatprep.subr.mxu0 0.0
      %783 = vmatpush2.msra.mxu0 0.0
      %784 = vmatprep.subr.mxu0 0.0
      %785 = vmatpush2.msra.mxu0 0.0
      %786 = vmatprep.subr.mxu0 0.0
      %787 = vmatpush2.msra.mxu0 0.0
      %788 = vmatprep.subr.mxu0 0.0
      %789 = vmatpush2.msra.mxu0 0.0
      %790 = vmatprep.subr.mxu0 0.0
      %791 = vmatpush2.msra.mxu0 0.0
      %792 = vmatprep.subr.mxu0 0.0
      %793 = vmatpush2.msra.mxu0 0.0
      %794 = vmatprep.subr.mxu0 0.0
      %795 = vmatpush2.msra.mxu0 0.0
      %796 = vmatprep.mubr.f32.mxu0 0.0
      %v797 = vand.u32 %v726, 4294901760
      %v798 = vsub.f32 %v726, %v797
      %v799 = vand.u32 %v798, 4294901760
      %v800 = vsub.f32 %v798, %v799
      %v801 = vand.u32 %v800, 4294901760
      %802 = vmatmul.mubr.f32.gmra.mxu0 %v801
      %v803 = vpop.f32.mrf.mxu0
      %v804 = vadd.f32 %v722, %v803
      %v805 = vpop.f32.mrf.mxu0
      %806 = vdwg.mxu0
      %807 = vmatprep.subr.mxu0 0.0
      %808 = vmatpush1.msra.mxu0 0.0
      %809 = vmatprep.subr.mxu0 0.0
      %810 = vmatpush1.msra.mxu0 0.0
      %811 = vmatprep.subr.mxu0 0.0
      %812 = vmatpush1.msra.mxu0 0.0
      %813 = vmatprep.subr.mxu0 0.0
      %814 = vmatpush1.msra.mxu0 0.0
      %815 = vmatprep.subr.mxu0 0.0
      %816 = vmatpush1.msra.mxu0 0.0
      %817 = vmatprep.subr.mxu0 0.0
      %818 = vmatpush1.msra.mxu0 0.0
      %819 = vmatprep.subr.mxu0 0.0
      %820 = vmatpush1.msra.mxu0 0.0
      %821 = vmatprep.subr.mxu0 0.0
      %822 = vmatpush1.msra.mxu0 0.0
      %823 = vmatprep.subr.mxu0 0.0
      %824 = vmatpush1.msra.mxu0 0.0
      %825 = vmatprep.subr.mxu0 0.0
      %826 = vmatpush1.msra.mxu0 0.0
      %827 = vmatprep.subr.mxu0 0.0
      %828 = vmatpush1.msra.mxu0 0.0
      %829 = vmatprep.subr.mxu0 0.0
      %830 = vmatpush1.msra.mxu0 0.0
      %831 = vmatprep.subr.mxu0 0.0
      %v832 = vand.u32 %v228, 4294901760
      %v833 = vsub.f32 %v228, %v832
      %v834 = vand.u32 %v833, 4294901760
      %v835 = vsub.f32 %v833, %v834
      %v836 = vand.u32 %v835, 4294901760
      %837 = vmatpush1.msra.mxu0 %v836
      %838 = vmatprep.subr.mxu0 0.0
      %v839 = vand.u32 %v227, 4294901760
      %v840 = vsub.f32 %v227, %v839
      %v841 = vand.u32 %v840, 4294901760
      %v842 = vsub.f32 %v840, %v841
      %v843 = vand.u32 %v842, 4294901760
      %844 = vmatpush1.msra.mxu0 %v843
      %845 = vmatprep.subr.mxu0 0.0
      %v846 = vand.u32 %v226, 4294901760
      %v847 = vsub.f32 %v226, %v846
      %v848 = vand.u32 %v847, 4294901760
      %v849 = vsub.f32 %v847, %v848
      %v850 = vand.u32 %v849, 4294901760
      %851 = vmatpush1.msra.mxu0 %v850
      %852 = vmatprep.subr.mxu0 0.0
      %v853 = vand.u32 %v225, 4294901760
      %v854 = vsub.f32 %v225, %v853
      %v855 = vand.u32 %v854, 4294901760
      %v856 = vsub.f32 %v854, %v855
      %v857 = vand.u32 %v856, 4294901760
      %858 = vmatpush1.msra.mxu0 %v857
      %859 = vmatprep.subr.mxu0 0.0
      %860 = vmatpush2.msra.mxu0 0.0
      %861 = vmatprep.subr.mxu0 0.0
      %862 = vmatpush2.msra.mxu0 0.0
      %863 = vmatprep.subr.mxu0 0.0
      %864 = vmatpush2.msra.mxu0 0.0
      %865 = vmatprep.subr.mxu0 0.0
      %866 = vmatpush2.msra.mxu0 0.0
      %867 = vmatprep.subr.mxu0 0.0
      %868 = vmatpush2.msra.mxu0 0.0
      %869 = vmatprep.subr.mxu0 0.0
      %870 = vmatpush2.msra.mxu0 0.0
      %871 = vmatprep.subr.mxu0 0.0
      %872 = vmatpush2.msra.mxu0 0.0
      %873 = vmatprep.subr.mxu0 0.0
      %874 = vmatpush2.msra.mxu0 0.0
      %875 = vmatprep.subr.mxu0 0.0
      %876 = vmatpush2.msra.mxu0 0.0
      %877 = vmatprep.subr.mxu0 0.0
      %878 = vmatpush2.msra.mxu0 0.0
      %879 = vmatprep.subr.mxu0 0.0
      %880 = vmatpush2.msra.mxu0 0.0
      %881 = vmatprep.subr.mxu0 0.0
      %882 = vmatpush2.msra.mxu0 0.0
      %883 = vmatprep.subr.mxu0 0.0
      %884 = vmatpush2.msra.mxu0 0.0
      %885 = vmatprep.subr.mxu0 0.0
      %886 = vmatpush2.msra.mxu0 0.0
      %887 = vmatprep.subr.mxu0 0.0
      %888 = vmatpush2.msra.mxu0 0.0
      %889 = vmatprep.subr.mxu0 0.0
      %890 = vmatpush2.msra.mxu0 0.0
      %891 = vmatprep.mubr.f32.mxu0 0.0
      %v892 = vand.u32 %v726, 4294901760
      %893 = vmatmul.mubr.f32.gmra.mxu0 %v892
      %v894 = vpop.f32.mrf.mxu0
      %v895 = vadd.f32 %v804, %v894
      %v896 = vpop.f32.mrf.mxu0
      %897 = vdwg.mxu0
      %898 = vmatprep.subr.mxu0 0.0
      %899 = vmatpush1.msra.mxu0 0.0
      %900 = vmatprep.subr.mxu0 0.0
      %901 = vmatpush1.msra.mxu0 0.0
      %902 = vmatprep.subr.mxu0 0.0
      %903 = vmatpush1.msra.mxu0 0.0
      %904 = vmatprep.subr.mxu0 0.0
      %905 = vmatpush1.msra.mxu0 0.0
      %906 = vmatprep.subr.mxu0 0.0
      %907 = vmatpush1.msra.mxu0 0.0
      %908 = vmatprep.subr.mxu0 0.0
      %909 = vmatpush1.msra.mxu0 0.0
      %910 = vmatprep.subr.mxu0 0.0
      %911 = vmatpush1.msra.mxu0 0.0
      %912 = vmatprep.subr.mxu0 0.0
      %913 = vmatpush1.msra.mxu0 0.0
      %914 = vmatprep.subr.mxu0 0.0
      %915 = vmatpush1.msra.mxu0 0.0
      %916 = vmatprep.subr.mxu0 0.0
      %917 = vmatpush1.msra.mxu0 0.0
      %918 = vmatprep.subr.mxu0 0.0
      %919 = vmatpush1.msra.mxu0 0.0
      %920 = vmatprep.subr.mxu0 0.0
      %921 = vmatpush1.msra.mxu0 0.0
      %922 = vmatprep.subr.mxu0 0.0
      %v923 = vand.u32 %v228, 4294901760
      %v924 = vsub.f32 %v228, %v923
      %925 = vmatpush1.msra.mxu0 %v924
      %926 = vmatprep.subr.mxu0 0.0
      %v927 = vand.u32 %v227, 4294901760
      %v928 = vsub.f32 %v227, %v927
      %929 = vmatpush1.msra.mxu0 %v928
      %930 = vmatprep.subr.mxu0 0.0
      %v931 = vand.u32 %v226, 4294901760
      %v932 = vsub.f32 %v226, %v931
      %933 = vmatpush1.msra.mxu0 %v932
      %934 = vmatprep.subr.mxu0 0.0
      %v935 = vand.u32 %v225, 4294901760
      %v936 = vsub.f32 %v225, %v935
      %937 = vmatpush1.msra.mxu0 %v936
      %938 = vmatprep.subr.mxu0 0.0
      %939 = vmatpush2.msra.mxu0 0.0
      %940 = vmatprep.subr.mxu0 0.0
      %941 = vmatpush2.msra.mxu0 0.0
      %942 = vmatprep.subr.mxu0 0.0
      %943 = vmatpush2.msra.mxu0 0.0
      %944 = vmatprep.subr.mxu0 0.0
      %945 = vmatpush2.msra.mxu0 0.0
      %946 = vmatprep.subr.mxu0 0.0
      %947 = vmatpush2.msra.mxu0 0.0
      %948 = vmatprep.subr.mxu0 0.0
      %949 = vmatpush2.msra.mxu0 0.0
      %950 = vmatprep.subr.mxu0 0.0
      %951 = vmatpush2.msra.mxu0 0.0
      %952 = vmatprep.subr.mxu0 0.0
      %953 = vmatpush2.msra.mxu0 0.0
      %954 = vmatprep.subr.mxu0 0.0
      %955 = vmatpush2.msra.mxu0 0.0
      %956 = vmatprep.subr.mxu0 0.0
      %957 = vmatpush2.msra.mxu0 0.0
      %958 = vmatprep.subr.mxu0 0.0
      %959 = vmatpush2.msra.mxu0 0.0
      %960 = vmatprep.subr.mxu0 0.0
      %961 = vmatpush2.msra.mxu0 0.0
      %962 = vmatprep.subr.mxu0 0.0
      %963 = vmatpush2.msra.mxu0 0.0
      %964 = vmatprep.subr.mxu0 0.0
      %965 = vmatpush2.msra.mxu0 0.0
      %966 = vmatprep.subr.mxu0 0.0
      %967 = vmatpush2.msra.mxu0 0.0
      %968 = vmatprep.subr.mxu0 0.0
      %969 = vmatpush2.msra.mxu0 0.0
      %970 = vmatprep.mubr.f32.mxu0 0.0
      %v971 = vand.u32 %v726, 4294901760
      %v972 = vsub.f32 %v726, %v971
      %973 = vmatmul.mubr.f32.gmra.mxu0 %v972
      %v974 = vpop.f32.mrf.mxu0
      %v975 = vadd.f32 %v895, %v974
      %v976 = vpop.f32.mrf.mxu0
      %977 = vdwg.mxu0
      %978 = vmatprep.subr.mxu0 0.0
      %979 = vmatpush1.msra.mxu0 0.0
      %980 = vmatprep.subr.mxu0 0.0
      %981 = vmatpush1.msra.mxu0 0.0
      %982 = vmatprep.subr.mxu0 0.0
      %983 = vmatpush1.msra.mxu0 0.0
      %984 = vmatprep.subr.mxu0 0.0
      %985 = vmatpush1.msra.mxu0 0.0
      %986 = vmatprep.subr.mxu0 0.0
      %987 = vmatpush1.msra.mxu0 0.0
      %988 = vmatprep.subr.mxu0 0.0
      %989 = vmatpush1.msra.mxu0 0.0
      %990 = vmatprep.subr.mxu0 0.0
      %991 = vmatpush1.msra.mxu0 0.0
      %992 = vmatprep.subr.mxu0 0.0
      %993 = vmatpush1.msra.mxu0 0.0
      %994 = vmatprep.subr.mxu0 0.0
      %995 = vmatpush1.msra.mxu0 0.0
      %996 = vmatprep.subr.mxu0 0.0
      %997 = vmatpush1.msra.mxu0 0.0
      %998 = vmatprep.subr.mxu0 0.0
      %999 = vmatpush1.msra.mxu0 0.0
      %1000 = vmatprep.subr.mxu0 0.0
      %1001 = vmatpush1.msra.mxu0 0.0
      %1002 = vmatprep.subr.mxu0 0.0
      %v1003 = vand.u32 %v228, 4294901760
      %1004 = vmatpush1.msra.mxu0 %v1003
      %1005 = vmatprep.subr.mxu0 0.0
      %v1006 = vand.u32 %v227, 4294901760
      %1007 = vmatpush1.msra.mxu0 %v1006
      %1008 = vmatprep.subr.mxu0 0.0
      %v1009 = vand.u32 %v226, 4294901760
      %1010 = vmatpush1.msra.mxu0 %v1009
      %1011 = vmatprep.subr.mxu0 0.0
      %v1012 = vand.u32 %v225, 4294901760
      %1013 = vmatpush1.msra.mxu0 %v1012
      %1014 = vmatprep.subr.mxu0 0.0
      %1015 = vmatpush2.msra.mxu0 0.0
      %1016 = vmatprep.subr.mxu0 0.0
      %1017 = vmatpush2.msra.mxu0 0.0
      %1018 = vmatprep.subr.mxu0 0.0
      %1019 = vmatpush2.msra.mxu0 0.0
      %1020 = vmatprep.subr.mxu0 0.0
      %1021 = vmatpush2.msra.mxu0 0.0
      %1022 = vmatprep.subr.mxu0 0.0
      %1023 = vmatpush2.msra.mxu0 0.0
      %1024 = vmatprep.subr.mxu0 0.0
      %1025 = vmatpush2.msra.mxu0 0.0
      %1026 = vmatprep.subr.mxu0 0.0
      %1027 = vmatpush2.msra.mxu0 0.0
      %1028 = vmatprep.subr.mxu0 0.0
      %1029 = vmatpush2.msra.mxu0 0.0
      %1030 = vmatprep.subr.mxu0 0.0
      %1031 = vmatpush2.msra.mxu0 0.0
      %1032 = vmatprep.subr.mxu0 0.0
      %1033 = vmatpush2.msra.mxu0 0.0
      %1034 = vmatprep.subr.mxu0 0.0
      %1035 = vmatpush2.msra.mxu0 0.0
      %1036 = vmatprep.subr.mxu0 0.0
      %1037 = vmatpush2.msra.mxu0 0.0
      %1038 = vmatprep.subr.mxu0 0.0
      %1039 = vmatpush2.msra.mxu0 0.0
      %1040 = vmatprep.subr.mxu0 0.0
      %1041 = vmatpush2.msra.mxu0 0.0
      %1042 = vmatprep.subr.mxu0 0.0
      %1043 = vmatpush2.msra.mxu0 0.0
      %1044 = vmatprep.subr.mxu0 0.0
      %1045 = vmatpush2.msra.mxu0 0.0
      %1046 = vmatprep.mubr.f32.mxu0 0.0
      %v1047 = vand.u32 %v726, 4294901760
      %v1048 = vsub.f32 %v726, %v1047
      %v1049 = vand.u32 %v1048, 4294901760
      %1050 = vmatmul.mubr.f32.gmra.mxu0 %v1049
      %v1051 = vpop.f32.mrf.mxu0
      %v1052 = vadd.f32 %v975, %v1051
      %v1053 = vpop.f32.mrf.mxu0
      %1054 = vdwg.mxu0
      %1055 = vmatprep.subr.mxu0 0.0
      %1056 = vmatpush1.msra.mxu0 0.0
      %1057 = vmatprep.subr.mxu0 0.0
      %1058 = vmatpush1.msra.mxu0 0.0
      %1059 = vmatprep.subr.mxu0 0.0
      %1060 = vmatpush1.msra.mxu0 0.0
      %1061 = vmatprep.subr.mxu0 0.0
      %1062 = vmatpush1.msra.mxu0 0.0
      %1063 = vmatprep.subr.mxu0 0.0
      %1064 = vmatpush1.msra.mxu0 0.0
      %1065 = vmatprep.subr.mxu0 0.0
      %1066 = vmatpush1.msra.mxu0 0.0
      %1067 = vmatprep.subr.mxu0 0.0
      %1068 = vmatpush1.msra.mxu0 0.0
      %1069 = vmatprep.subr.mxu0 0.0
      %1070 = vmatpush1.msra.mxu0 0.0
      %1071 = vmatprep.subr.mxu0 0.0
      %1072 = vmatpush1.msra.mxu0 0.0
      %1073 = vmatprep.subr.mxu0 0.0
      %1074 = vmatpush1.msra.mxu0 0.0
      %1075 = vmatprep.subr.mxu0 0.0
      %1076 = vmatpush1.msra.mxu0 0.0
      %1077 = vmatprep.subr.mxu0 0.0
      %1078 = vmatpush1.msra.mxu0 0.0
      %1079 = vmatprep.subr.mxu0 0.0
      %v1080 = vand.u32 %v228, 4294901760
      %v1081 = vsub.f32 %v228, %v1080
      %v1082 = vand.u32 %v1081, 4294901760
      %1083 = vmatpush1.msra.mxu0 %v1082
      %1084 = vmatprep.subr.mxu0 0.0
      %v1085 = vand.u32 %v227, 4294901760
      %v1086 = vsub.f32 %v227, %v1085
      %v1087 = vand.u32 %v1086, 4294901760
      %1088 = vmatpush1.msra.mxu0 %v1087
      %1089 = vmatprep.subr.mxu0 0.0
      %v1090 = vand.u32 %v226, 4294901760
      %v1091 = vsub.f32 %v226, %v1090
      %v1092 = vand.u32 %v1091, 4294901760
      %1093 = vmatpush1.msra.mxu0 %v1092
      %1094 = vmatprep.subr.mxu0 0.0
      %v1095 = vand.u32 %v225, 4294901760
      %v1096 = vsub.f32 %v225, %v1095
      %v1097 = vand.u32 %v1096, 4294901760
      %1098 = vmatpush1.msra.mxu0 %v1097
      %1099 = vmatprep.subr.mxu0 0.0
      %1100 = vmatpush2.msra.mxu0 0.0
      %1101 = vmatprep.subr.mxu0 0.0
      %1102 = vmatpush2.msra.mxu0 0.0
      %1103 = vmatprep.subr.mxu0 0.0
      %1104 = vmatpush2.msra.mxu0 0.0
      %1105 = vmatprep.subr.mxu0 0.0
      %1106 = vmatpush2.msra.mxu0 0.0
      %1107 = vmatprep.subr.mxu0 0.0
      %1108 = vmatpush2.msra.mxu0 0.0
      %1109 = vmatprep.subr.mxu0 0.0
      %1110 = vmatpush2.msra.mxu0 0.0
      %1111 = vmatprep.subr.mxu0 0.0
      %1112 = vmatpush2.msra.mxu0 0.0
      %1113 = vmatprep.subr.mxu0 0.0
      %1114 = vmatpush2.msra.mxu0 0.0
      %1115 = vmatprep.subr.mxu0 0.0
      %1116 = vmatpush2.msra.mxu0 0.0
      %1117 = vmatprep.subr.mxu0 0.0
      %1118 = vmatpush2.msra.mxu0 0.0
      %1119 = vmatprep.subr.mxu0 0.0
      %1120 = vmatpush2.msra.mxu0 0.0
      %1121 = vmatprep.subr.mxu0 0.0
      %1122 = vmatpush2.msra.mxu0 0.0
      %1123 = vmatprep.subr.mxu0 0.0
      %1124 = vmatpush2.msra.mxu0 0.0
      %1125 = vmatprep.subr.mxu0 0.0
      %1126 = vmatpush2.msra.mxu0 0.0
      %1127 = vmatprep.subr.mxu0 0.0
      %1128 = vmatpush2.msra.mxu0 0.0
      %1129 = vmatprep.subr.mxu0 0.0
      %1130 = vmatpush2.msra.mxu0 0.0
      %1131 = vmatprep.mubr.f32.mxu0 0.0
      %v1132 = vand.u32 %v726, 4294901760
      %1133 = vmatmul.mubr.f32.gmra.mxu0 %v1132
      %v1134 = vpop.f32.mrf.mxu0
      %v1135 = vadd.f32 %v1052, %v1134
      %v1136 = vpop.f32.mrf.mxu0
      %1137 = vdwg.mxu0
      %1138 = vmatprep.subr.mxu0 0.0
      %1139 = vmatpush1.msra.mxu0 0.0
      %1140 = vmatprep.subr.mxu0 0.0
      %1141 = vmatpush1.msra.mxu0 0.0
      %1142 = vmatprep.subr.mxu0 0.0
      %1143 = vmatpush1.msra.mxu0 0.0
      %1144 = vmatprep.subr.mxu0 0.0
      %1145 = vmatpush1.msra.mxu0 0.0
      %1146 = vmatprep.subr.mxu0 0.0
      %1147 = vmatpush1.msra.mxu0 0.0
      %1148 = vmatprep.subr.mxu0 0.0
      %1149 = vmatpush1.msra.mxu0 0.0
      %1150 = vmatprep.subr.mxu0 0.0
      %1151 = vmatpush1.msra.mxu0 0.0
      %1152 = vmatprep.subr.mxu0 0.0
      %1153 = vmatpush1.msra.mxu0 0.0
      %1154 = vmatprep.subr.mxu0 0.0
      %1155 = vmatpush1.msra.mxu0 0.0
      %1156 = vmatprep.subr.mxu0 0.0
      %1157 = vmatpush1.msra.mxu0 0.0
      %1158 = vmatprep.subr.mxu0 0.0
      %1159 = vmatpush1.msra.mxu0 0.0
      %1160 = vmatprep.subr.mxu0 0.0
      %1161 = vmatpush1.msra.mxu0 0.0
      %1162 = vmatprep.subr.mxu0 0.0
      %v1163 = vand.u32 %v228, 4294901760
      %1164 = vmatpush1.msra.mxu0 %v1163
      %1165 = vmatprep.subr.mxu0 0.0
      %v1166 = vand.u32 %v227, 4294901760
      %1167 = vmatpush1.msra.mxu0 %v1166
      %1168 = vmatprep.subr.mxu0 0.0
      %v1169 = vand.u32 %v226, 4294901760
      %1170 = vmatpush1.msra.mxu0 %v1169
      %1171 = vmatprep.subr.mxu0 0.0
      %v1172 = vand.u32 %v225, 4294901760
      %1173 = vmatpush1.msra.mxu0 %v1172
      %1174 = vmatprep.subr.mxu0 0.0
      %1175 = vmatpush2.msra.mxu0 0.0
      %1176 = vmatprep.subr.mxu0 0.0
      %1177 = vmatpush2.msra.mxu0 0.0
      %1178 = vmatprep.subr.mxu0 0.0
      %1179 = vmatpush2.msra.mxu0 0.0
      %1180 = vmatprep.subr.mxu0 0.0
      %1181 = vmatpush2.msra.mxu0 0.0
      %1182 = vmatprep.subr.mxu0 0.0
      %1183 = vmatpush2.msra.mxu0 0.0
      %1184 = vmatprep.subr.mxu0 0.0
      %1185 = vmatpush2.msra.mxu0 0.0
      %1186 = vmatprep.subr.mxu0 0.0
      %1187 = vmatpush2.msra.mxu0 0.0
      %1188 = vmatprep.subr.mxu0 0.0
      %1189 = vmatpush2.msra.mxu0 0.0
      %1190 = vmatprep.subr.mxu0 0.0
      %1191 = vmatpush2.msra.mxu0 0.0
      %1192 = vmatprep.subr.mxu0 0.0
      %1193 = vmatpush2.msra.mxu0 0.0
      %1194 = vmatprep.subr.mxu0 0.0
      %1195 = vmatpush2.msra.mxu0 0.0
      %1196 = vmatprep.subr.mxu0 0.0
      %1197 = vmatpush2.msra.mxu0 0.0
      %1198 = vmatprep.subr.mxu0 0.0
      %1199 = vmatpush2.msra.mxu0 0.0
      %1200 = vmatprep.subr.mxu0 0.0
      %1201 = vmatpush2.msra.mxu0 0.0
      %1202 = vmatprep.subr.mxu0 0.0
      %1203 = vmatpush2.msra.mxu0 0.0
      %1204 = vmatprep.subr.mxu0 0.0
      %1205 = vmatpush2.msra.mxu0 0.0
      %1206 = vmatprep.mubr.f32.mxu0 0.0
      %v1207 = vand.u32 %v726, 4294901760
      %1208 = vmatmul.mubr.f32.gmra.mxu0 %v1207
      %v1209 = vpop.f32.mrf.mxu0
      %v1210 = vadd.f32 %v1135, %v1209
      %v1211 = vpop.f32.mrf.mxu0
      %1212 = vdwg.mxu0
      %s1213 = scalar_lea.vmem %s213, 16
      %v1214 = vld [vmem:[%s1213] sm:$0xff]
      %s1215 = scalar_lea.vmem %s1, 64
      %v1216 = vld [vmem:[%s1215] sm:$0xff]
      %v1217 = vld [vmem:[%s1215 + $0x8] sm:$0xff]
      %v1218 = vld [vmem:[%s1215 + $0x10] sm:$0xff]
      %v1219 = vld [vmem:[%s1215 + $0x18] sm:$0xff]
      %v1221 = vsel %vm236, %v1214, 0
      %1223 = vmatprep.subr.mxu0 0.0
      %1224 = vmatpush1.msra.mxu0 0.0
      %1225 = vmatprep.subr.mxu0 0.0
      %1226 = vmatpush1.msra.mxu0 0.0
      %1227 = vmatprep.subr.mxu0 0.0
      %1228 = vmatpush1.msra.mxu0 0.0
      %1229 = vmatprep.subr.mxu0 0.0
      %1230 = vmatpush1.msra.mxu0 0.0
      %1231 = vmatprep.subr.mxu0 0.0
      %1232 = vmatpush1.msra.mxu0 0.0
      %1233 = vmatprep.subr.mxu0 0.0
      %1234 = vmatpush1.msra.mxu0 0.0
      %1235 = vmatprep.subr.mxu0 0.0
      %1236 = vmatpush1.msra.mxu0 0.0
      %1237 = vmatprep.subr.mxu0 0.0
      %1238 = vmatpush1.msra.mxu0 0.0
      %1239 = vmatprep.subr.mxu0 0.0
      %1240 = vmatpush1.msra.mxu0 0.0
      %1241 = vmatprep.subr.mxu0 0.0
      %1242 = vmatpush1.msra.mxu0 0.0
      %1243 = vmatprep.subr.mxu0 0.0
      %1244 = vmatpush1.msra.mxu0 0.0
      %1245 = vmatprep.subr.mxu0 0.0
      %1246 = vmatpush1.msra.mxu0 0.0
      %1247 = vmatprep.subr.mxu0 0.0
      %v1248 = vand.u32 %v1219, 4294901760
      %1249 = vmatpush1.msra.mxu0 %v1248
      %1250 = vmatprep.subr.mxu0 0.0
      %v1251 = vand.u32 %v1218, 4294901760
      %1252 = vmatpush1.msra.mxu0 %v1251
      %1253 = vmatprep.subr.mxu0 0.0
      %v1254 = vand.u32 %v1217, 4294901760
      %1255 = vmatpush1.msra.mxu0 %v1254
      %1256 = vmatprep.subr.mxu0 0.0
      %v1257 = vand.u32 %v1216, 4294901760
      %1258 = vmatpush1.msra.mxu0 %v1257
      %1259 = vmatprep.subr.mxu0 0.0
      %1260 = vmatpush2.msra.mxu0 0.0
      %1261 = vmatprep.subr.mxu0 0.0
      %1262 = vmatpush2.msra.mxu0 0.0
      %1263 = vmatprep.subr.mxu0 0.0
      %1264 = vmatpush2.msra.mxu0 0.0
      %1265 = vmatprep.subr.mxu0 0.0
      %1266 = vmatpush2.msra.mxu0 0.0
      %1267 = vmatprep.subr.mxu0 0.0
      %1268 = vmatpush2.msra.mxu0 0.0
      %1269 = vmatprep.subr.mxu0 0.0
      %1270 = vmatpush2.msra.mxu0 0.0
      %1271 = vmatprep.subr.mxu0 0.0
      %1272 = vmatpush2.msra.mxu0 0.0
      %1273 = vmatprep.subr.mxu0 0.0
      %1274 = vmatpush2.msra.mxu0 0.0
      %1275 = vmatprep.subr.mxu0 0.0
      %1276 = vmatpush2.msra.mxu0 0.0
      %1277 = vmatprep.subr.mxu0 0.0
      %1278 = vmatpush2.msra.mxu0 0.0
      %1279 = vmatprep.subr.mxu0 0.0
      %1280 = vmatpush2.msra.mxu0 0.0
      %1281 = vmatprep.subr.mxu0 0.0
      %1282 = vmatpush2.msra.mxu0 0.0
      %1283 = vmatprep.subr.mxu0 0.0
      %1284 = vmatpush2.msra.mxu0 0.0
      %1285 = vmatprep.subr.mxu0 0.0
      %1286 = vmatpush2.msra.mxu0 0.0
      %1287 = vmatprep.subr.mxu0 0.0
      %1288 = vmatpush2.msra.mxu0 0.0
      %1289 = vmatprep.subr.mxu0 0.0
      %1290 = vmatpush2.msra.mxu0 0.0
      %1291 = vmatprep.mubr.f32.mxu0 0.0
      %v1292 = vand.u32 %v1221, 4294901760
      %v1293 = vsub.f32 %v1221, %v1292
      %v1294 = vand.u32 %v1293, 4294901760
      %v1295 = vsub.f32 %v1293, %v1294
      %v1296 = vand.u32 %v1295, 4294901760
      %1297 = vmatmul.mubr.f32.gmra.mxu0 %v1296
      %v1298 = vpop.f32.mrf.mxu0
      %v1299 = vadd.f32 0.0, %v1298
      %v1300 = vpop.f32.mrf.mxu0
      %1301 = vdwg.mxu0
      %1302 = vmatprep.subr.mxu0 0.0
      %1303 = vmatpush1.msra.mxu0 0.0
      %1304 = vmatprep.subr.mxu0 0.0
      %1305 = vmatpush1.msra.mxu0 0.0
      %1306 = vmatprep.subr.mxu0 0.0
      %1307 = vmatpush1.msra.mxu0 0.0
      %1308 = vmatprep.subr.mxu0 0.0
      %1309 = vmatpush1.msra.mxu0 0.0
      %1310 = vmatprep.subr.mxu0 0.0
      %1311 = vmatpush1.msra.mxu0 0.0
      %1312 = vmatprep.subr.mxu0 0.0
      %1313 = vmatpush1.msra.mxu0 0.0
      %1314 = vmatprep.subr.mxu0 0.0
      %1315 = vmatpush1.msra.mxu0 0.0
      %1316 = vmatprep.subr.mxu0 0.0
      %1317 = vmatpush1.msra.mxu0 0.0
      %1318 = vmatprep.subr.mxu0 0.0
      %1319 = vmatpush1.msra.mxu0 0.0
      %1320 = vmatprep.subr.mxu0 0.0
      %1321 = vmatpush1.msra.mxu0 0.0
      %1322 = vmatprep.subr.mxu0 0.0
      %1323 = vmatpush1.msra.mxu0 0.0
      %1324 = vmatprep.subr.mxu0 0.0
      %1325 = vmatpush1.msra.mxu0 0.0
      %1326 = vmatprep.subr.mxu0 0.0
      %v1327 = vand.u32 %v1219, 4294901760
      %v1328 = vsub.f32 %v1219, %v1327
      %v1329 = vand.u32 %v1328, 4294901760
      %v1330 = vsub.f32 %v1328, %v1329
      %v1331 = vand.u32 %v1330, 4294901760
      %1332 = vmatpush1.msra.mxu0 %v1331
      %1333 = vmatprep.subr.mxu0 0.0
      %v1334 = vand.u32 %v1218, 4294901760
      %v1335 = vsub.f32 %v1218, %v1334
      %v1336 = vand.u32 %v1335, 4294901760
      %v1337 = vsub.f32 %v1335, %v1336
      %v1338 = vand.u32 %v1337, 4294901760
      %1339 = vmatpush1.msra.mxu0 %v1338
      %1340 = vmatprep.subr.mxu0 0.0
      %v1341 = vand.u32 %v1217, 4294901760
      %v1342 = vsub.f32 %v1217, %v1341
      %v1343 = vand.u32 %v1342, 4294901760
      %v1344 = vsub.f32 %v1342, %v1343
      %v1345 = vand.u32 %v1344, 4294901760
      %1346 = vmatpush1.msra.mxu0 %v1345
      %1347 = vmatprep.subr.mxu0 0.0
      %v1348 = vand.u32 %v1216, 4294901760
      %v1349 = vsub.f32 %v1216, %v1348
      %v1350 = vand.u32 %v1349, 4294901760
      %v1351 = vsub.f32 %v1349, %v1350
      %v1352 = vand.u32 %v1351, 4294901760
      %1353 = vmatpush1.msra.mxu0 %v1352
      %1354 = vmatprep.subr.mxu0 0.0
      %1355 = vmatpush2.msra.mxu0 0.0
      %1356 = vmatprep.subr.mxu0 0.0
      %1357 = vmatpush2.msra.mxu0 0.0
      %1358 = vmatprep.subr.mxu0 0.0
      %1359 = vmatpush2.msra.mxu0 0.0
      %1360 = vmatprep.subr.mxu0 0.0
      %1361 = vmatpush2.msra.mxu0 0.0
      %1362 = vmatprep.subr.mxu0 0.0
      %1363 = vmatpush2.msra.mxu0 0.0
      %1364 = vmatprep.subr.mxu0 0.0
      %1365 = vmatpush2.msra.mxu0 0.0
      %1366 = vmatprep.subr.mxu0 0.0
      %1367 = vmatpush2.msra.mxu0 0.0
      %1368 = vmatprep.subr.mxu0 0.0
      %1369 = vmatpush2.msra.mxu0 0.0
      %1370 = vmatprep.subr.mxu0 0.0
      %1371 = vmatpush2.msra.mxu0 0.0
      %1372 = vmatprep.subr.mxu0 0.0
      %1373 = vmatpush2.msra.mxu0 0.0
      %1374 = vmatprep.subr.mxu0 0.0
      %1375 = vmatpush2.msra.mxu0 0.0
      %1376 = vmatprep.subr.mxu0 0.0
      %1377 = vmatpush2.msra.mxu0 0.0
      %1378 = vmatprep.subr.mxu0 0.0
      %1379 = vmatpush2.msra.mxu0 0.0
      %1380 = vmatprep.subr.mxu0 0.0
      %1381 = vmatpush2.msra.mxu0 0.0
      %1382 = vmatprep.subr.mxu0 0.0
      %1383 = vmatpush2.msra.mxu0 0.0
      %1384 = vmatprep.subr.mxu0 0.0
      %1385 = vmatpush2.msra.mxu0 0.0
      %1386 = vmatprep.mubr.f32.mxu0 0.0
      %v1387 = vand.u32 %v1221, 4294901760
      %1388 = vmatmul.mubr.f32.gmra.mxu0 %v1387
      %v1389 = vpop.f32.mrf.mxu0
      %v1390 = vadd.f32 %v1299, %v1389
      %v1391 = vpop.f32.mrf.mxu0
      %1392 = vdwg.mxu0
      %1393 = vmatprep.subr.mxu0 0.0
      %1394 = vmatpush1.msra.mxu0 0.0
      %1395 = vmatprep.subr.mxu0 0.0
      %1396 = vmatpush1.msra.mxu0 0.0
      %1397 = vmatprep.subr.mxu0 0.0
      %1398 = vmatpush1.msra.mxu0 0.0
      %1399 = vmatprep.subr.mxu0 0.0
      %1400 = vmatpush1.msra.mxu0 0.0
      %1401 = vmatprep.subr.mxu0 0.0
      %1402 = vmatpush1.msra.mxu0 0.0
      %1403 = vmatprep.subr.mxu0 0.0
      %1404 = vmatpush1.msra.mxu0 0.0
      %1405 = vmatprep.subr.mxu0 0.0
      %1406 = vmatpush1.msra.mxu0 0.0
      %1407 = vmatprep.subr.mxu0 0.0
      %1408 = vmatpush1.msra.mxu0 0.0
      %1409 = vmatprep.subr.mxu0 0.0
      %1410 = vmatpush1.msra.mxu0 0.0
      %1411 = vmatprep.subr.mxu0 0.0
      %1412 = vmatpush1.msra.mxu0 0.0
      %1413 = vmatprep.subr.mxu0 0.0
      %1414 = vmatpush1.msra.mxu0 0.0
      %1415 = vmatprep.subr.mxu0 0.0
      %1416 = vmatpush1.msra.mxu0 0.0
      %1417 = vmatprep.subr.mxu0 0.0
      %v1418 = vand.u32 %v1219, 4294901760
      %v1419 = vsub.f32 %v1219, %v1418
      %1420 = vmatpush1.msra.mxu0 %v1419
      %1421 = vmatprep.subr.mxu0 0.0
      %v1422 = vand.u32 %v1218, 4294901760
      %v1423 = vsub.f32 %v1218, %v1422
      %1424 = vmatpush1.msra.mxu0 %v1423
      %1425 = vmatprep.subr.mxu0 0.0
      %v1426 = vand.u32 %v1217, 4294901760
      %v1427 = vsub.f32 %v1217, %v1426
      %1428 = vmatpush1.msra.mxu0 %v1427
      %1429 = vmatprep.subr.mxu0 0.0
      %v1430 = vand.u32 %v1216, 4294901760
      %v1431 = vsub.f32 %v1216, %v1430
      %1432 = vmatpush1.msra.mxu0 %v1431
      %1433 = vmatprep.subr.mxu0 0.0
      %1434 = vmatpush2.msra.mxu0 0.0
      %1435 = vmatprep.subr.mxu0 0.0
      %1436 = vmatpush2.msra.mxu0 0.0
      %1437 = vmatprep.subr.mxu0 0.0
      %1438 = vmatpush2.msra.mxu0 0.0
      %1439 = vmatprep.subr.mxu0 0.0
      %1440 = vmatpush2.msra.mxu0 0.0
      %1441 = vmatprep.subr.mxu0 0.0
      %1442 = vmatpush2.msra.mxu0 0.0
      %1443 = vmatprep.subr.mxu0 0.0
      %1444 = vmatpush2.msra.mxu0 0.0
      %1445 = vmatprep.subr.mxu0 0.0
      %1446 = vmatpush2.msra.mxu0 0.0
      %1447 = vmatprep.subr.mxu0 0.0
      %1448 = vmatpush2.msra.mxu0 0.0
      %1449 = vmatprep.subr.mxu0 0.0
      %1450 = vmatpush2.msra.mxu0 0.0
      %1451 = vmatprep.subr.mxu0 0.0
      %1452 = vmatpush2.msra.mxu0 0.0
      %1453 = vmatprep.subr.mxu0 0.0
      %1454 = vmatpush2.msra.mxu0 0.0
      %1455 = vmatprep.subr.mxu0 0.0
      %1456 = vmatpush2.msra.mxu0 0.0
      %1457 = vmatprep.subr.mxu0 0.0
      %1458 = vmatpush2.msra.mxu0 0.0
      %1459 = vmatprep.subr.mxu0 0.0
      %1460 = vmatpush2.msra.mxu0 0.0
      %1461 = vmatprep.subr.mxu0 0.0
      %1462 = vmatpush2.msra.mxu0 0.0
      %1463 = vmatprep.subr.mxu0 0.0
      %1464 = vmatpush2.msra.mxu0 0.0
      %1465 = vmatprep.mubr.f32.mxu0 0.0
      %v1466 = vand.u32 %v1221, 4294901760
      %v1467 = vsub.f32 %v1221, %v1466
      %1468 = vmatmul.mubr.f32.gmra.mxu0 %v1467
      %v1469 = vpop.f32.mrf.mxu0
      %v1470 = vadd.f32 %v1390, %v1469
      %v1471 = vpop.f32.mrf.mxu0
      %1472 = vdwg.mxu0
      %1473 = vmatprep.subr.mxu0 0.0
      %1474 = vmatpush1.msra.mxu0 0.0
      %1475 = vmatprep.subr.mxu0 0.0
      %1476 = vmatpush1.msra.mxu0 0.0
      %1477 = vmatprep.subr.mxu0 0.0
      %1478 = vmatpush1.msra.mxu0 0.0
      %1479 = vmatprep.subr.mxu0 0.0
      %1480 = vmatpush1.msra.mxu0 0.0
      %1481 = vmatprep.subr.mxu0 0.0
      %1482 = vmatpush1.msra.mxu0 0.0
      %1483 = vmatprep.subr.mxu0 0.0
      %1484 = vmatpush1.msra.mxu0 0.0
      %1485 = vmatprep.subr.mxu0 0.0
      %1486 = vmatpush1.msra.mxu0 0.0
      %1487 = vmatprep.subr.mxu0 0.0
      %1488 = vmatpush1.msra.mxu0 0.0
      %1489 = vmatprep.subr.mxu0 0.0
      %1490 = vmatpush1.msra.mxu0 0.0
      %1491 = vmatprep.subr.mxu0 0.0
      %1492 = vmatpush1.msra.mxu0 0.0
      %1493 = vmatprep.subr.mxu0 0.0
      %1494 = vmatpush1.msra.mxu0 0.0
      %1495 = vmatprep.subr.mxu0 0.0
      %1496 = vmatpush1.msra.mxu0 0.0
      %1497 = vmatprep.subr.mxu0 0.0
      %v1498 = vand.u32 %v1219, 4294901760
      %1499 = vmatpush1.msra.mxu0 %v1498
      %1500 = vmatprep.subr.mxu0 0.0
      %v1501 = vand.u32 %v1218, 4294901760
      %1502 = vmatpush1.msra.mxu0 %v1501
      %1503 = vmatprep.subr.mxu0 0.0
      %v1504 = vand.u32 %v1217, 4294901760
      %1505 = vmatpush1.msra.mxu0 %v1504
      %1506 = vmatprep.subr.mxu0 0.0
      %v1507 = vand.u32 %v1216, 4294901760
      %1508 = vmatpush1.msra.mxu0 %v1507
      %1509 = vmatprep.subr.mxu0 0.0
      %1510 = vmatpush2.msra.mxu0 0.0
      %1511 = vmatprep.subr.mxu0 0.0
      %1512 = vmatpush2.msra.mxu0 0.0
      %1513 = vmatprep.subr.mxu0 0.0
      %1514 = vmatpush2.msra.mxu0 0.0
      %1515 = vmatprep.subr.mxu0 0.0
      %1516 = vmatpush2.msra.mxu0 0.0
      %1517 = vmatprep.subr.mxu0 0.0
      %1518 = vmatpush2.msra.mxu0 0.0
      %1519 = vmatprep.subr.mxu0 0.0
      %1520 = vmatpush2.msra.mxu0 0.0
      %1521 = vmatprep.subr.mxu0 0.0
      %1522 = vmatpush2.msra.mxu0 0.0
      %1523 = vmatprep.subr.mxu0 0.0
      %1524 = vmatpush2.msra.mxu0 0.0
      %1525 = vmatprep.subr.mxu0 0.0
      %1526 = vmatpush2.msra.mxu0 0.0
      %1527 = vmatprep.subr.mxu0 0.0
      %1528 = vmatpush2.msra.mxu0 0.0
      %1529 = vmatprep.subr.mxu0 0.0
      %1530 = vmatpush2.msra.mxu0 0.0
      %1531 = vmatprep.subr.mxu0 0.0
      %1532 = vmatpush2.msra.mxu0 0.0
      %1533 = vmatprep.subr.mxu0 0.0
      %1534 = vmatpush2.msra.mxu0 0.0
      %1535 = vmatprep.subr.mxu0 0.0
      %1536 = vmatpush2.msra.mxu0 0.0
      %1537 = vmatprep.subr.mxu0 0.0
      %1538 = vmatpush2.msra.mxu0 0.0
      %1539 = vmatprep.subr.mxu0 0.0
      %1540 = vmatpush2.msra.mxu0 0.0
      %1541 = vmatprep.mubr.f32.mxu0 0.0
      %v1542 = vand.u32 %v1221, 4294901760
      %v1543 = vsub.f32 %v1221, %v1542
      %v1544 = vand.u32 %v1543, 4294901760
      %1545 = vmatmul.mubr.f32.gmra.mxu0 %v1544
      %v1546 = vpop.f32.mrf.mxu0
      %v1547 = vadd.f32 %v1470, %v1546
      %v1548 = vpop.f32.mrf.mxu0
      %1549 = vdwg.mxu0
      %1550 = vmatprep.subr.mxu0 0.0
      %1551 = vmatpush1.msra.mxu0 0.0
      %1552 = vmatprep.subr.mxu0 0.0
      %1553 = vmatpush1.msra.mxu0 0.0
      %1554 = vmatprep.subr.mxu0 0.0
      %1555 = vmatpush1.msra.mxu0 0.0
      %1556 = vmatprep.subr.mxu0 0.0
      %1557 = vmatpush1.msra.mxu0 0.0
      %1558 = vmatprep.subr.mxu0 0.0
      %1559 = vmatpush1.msra.mxu0 0.0
      %1560 = vmatprep.subr.mxu0 0.0
      %1561 = vmatpush1.msra.mxu0 0.0
      %1562 = vmatprep.subr.mxu0 0.0
      %1563 = vmatpush1.msra.mxu0 0.0
      %1564 = vmatprep.subr.mxu0 0.0
      %1565 = vmatpush1.msra.mxu0 0.0
      %1566 = vmatprep.subr.mxu0 0.0
      %1567 = vmatpush1.msra.mxu0 0.0
      %1568 = vmatprep.subr.mxu0 0.0
      %1569 = vmatpush1.msra.mxu0 0.0
      %1570 = vmatprep.subr.mxu0 0.0
      %1571 = vmatpush1.msra.mxu0 0.0
      %1572 = vmatprep.subr.mxu0 0.0
      %1573 = vmatpush1.msra.mxu0 0.0
      %1574 = vmatprep.subr.mxu0 0.0
      %v1575 = vand.u32 %v1219, 4294901760
      %v1576 = vsub.f32 %v1219, %v1575
      %v1577 = vand.u32 %v1576, 4294901760
      %1578 = vmatpush1.msra.mxu0 %v1577
      %1579 = vmatprep.subr.mxu0 0.0
      %v1580 = vand.u32 %v1218, 4294901760
      %v1581 = vsub.f32 %v1218, %v1580
      %v1582 = vand.u32 %v1581, 4294901760
      %1583 = vmatpush1.msra.mxu0 %v1582
      %1584 = vmatprep.subr.mxu0 0.0
      %v1585 = vand.u32 %v1217, 4294901760
      %v1586 = vsub.f32 %v1217, %v1585
      %v1587 = vand.u32 %v1586, 4294901760
      %1588 = vmatpush1.msra.mxu0 %v1587
      %1589 = vmatprep.subr.mxu0 0.0
      %v1590 = vand.u32 %v1216, 4294901760
      %v1591 = vsub.f32 %v1216, %v1590
      %v1592 = vand.u32 %v1591, 4294901760
      %1593 = vmatpush1.msra.mxu0 %v1592
      %1594 = vmatprep.subr.mxu0 0.0
      %1595 = vmatpush2.msra.mxu0 0.0
      %1596 = vmatprep.subr.mxu0 0.0
      %1597 = vmatpush2.msra.mxu0 0.0
      %1598 = vmatprep.subr.mxu0 0.0
      %1599 = vmatpush2.msra.mxu0 0.0
      %1600 = vmatprep.subr.mxu0 0.0
      %1601 = vmatpush2.msra.mxu0 0.0
      %1602 = vmatprep.subr.mxu0 0.0
      %1603 = vmatpush2.msra.mxu0 0.0
      %1604 = vmatprep.subr.mxu0 0.0
      %1605 = vmatpush2.msra.mxu0 0.0
      %1606 = vmatprep.subr.mxu0 0.0
      %1607 = vmatpush2.msra.mxu0 0.0
      %1608 = vmatprep.subr.mxu0 0.0
      %1609 = vmatpush2.msra.mxu0 0.0
      %1610 = vmatprep.subr.mxu0 0.0
      %1611 = vmatpush2.msra.mxu0 0.0
      %1612 = vmatprep.subr.mxu0 0.0
      %1613 = vmatpush2.msra.mxu0 0.0
      %1614 = vmatprep.subr.mxu0 0.0
      %1615 = vmatpush2.msra.mxu0 0.0
      %1616 = vmatprep.subr.mxu0 0.0
      %1617 = vmatpush2.msra.mxu0 0.0
      %1618 = vmatprep.subr.mxu0 0.0
      %1619 = vmatpush2.msra.mxu0 0.0
      %1620 = vmatprep.subr.mxu0 0.0
      %1621 = vmatpush2.msra.mxu0 0.0
      %1622 = vmatprep.subr.mxu0 0.0
      %1623 = vmatpush2.msra.mxu0 0.0
      %1624 = vmatprep.subr.mxu0 0.0
      %1625 = vmatpush2.msra.mxu0 0.0
      %1626 = vmatprep.mubr.f32.mxu0 0.0
      %v1627 = vand.u32 %v1221, 4294901760
      %1628 = vmatmul.mubr.f32.gmra.mxu0 %v1627
      %v1629 = vpop.f32.mrf.mxu0
      %v1630 = vadd.f32 %v1547, %v1629
      %v1631 = vpop.f32.mrf.mxu0
      %1632 = vdwg.mxu0
      %1633 = vmatprep.subr.mxu0 0.0
      %1634 = vmatpush1.msra.mxu0 0.0
      %1635 = vmatprep.subr.mxu0 0.0
      %1636 = vmatpush1.msra.mxu0 0.0
      %1637 = vmatprep.subr.mxu0 0.0
      %1638 = vmatpush1.msra.mxu0 0.0
      %1639 = vmatprep.subr.mxu0 0.0
      %1640 = vmatpush1.msra.mxu0 0.0
      %1641 = vmatprep.subr.mxu0 0.0
      %1642 = vmatpush1.msra.mxu0 0.0
      %1643 = vmatprep.subr.mxu0 0.0
      %1644 = vmatpush1.msra.mxu0 0.0
      %1645 = vmatprep.subr.mxu0 0.0
      %1646 = vmatpush1.msra.mxu0 0.0
      %1647 = vmatprep.subr.mxu0 0.0
      %1648 = vmatpush1.msra.mxu0 0.0
      %1649 = vmatprep.subr.mxu0 0.0
      %1650 = vmatpush1.msra.mxu0 0.0
      %1651 = vmatprep.subr.mxu0 0.0
      %1652 = vmatpush1.msra.mxu0 0.0
      %1653 = vmatprep.subr.mxu0 0.0
      %1654 = vmatpush1.msra.mxu0 0.0
      %1655 = vmatprep.subr.mxu0 0.0
      %1656 = vmatpush1.msra.mxu0 0.0
      %1657 = vmatprep.subr.mxu0 0.0
      %v1658 = vand.u32 %v1219, 4294901760
      %1659 = vmatpush1.msra.mxu0 %v1658
      %1660 = vmatprep.subr.mxu0 0.0
      %v1661 = vand.u32 %v1218, 4294901760
      %1662 = vmatpush1.msra.mxu0 %v1661
      %1663 = vmatprep.subr.mxu0 0.0
      %v1664 = vand.u32 %v1217, 4294901760
      %1665 = vmatpush1.msra.mxu0 %v1664
      %1666 = vmatprep.subr.mxu0 0.0
      %v1667 = vand.u32 %v1216, 4294901760
      %1668 = vmatpush1.msra.mxu0 %v1667
      %1669 = vmatprep.subr.mxu0 0.0
      %1670 = vmatpush2.msra.mxu0 0.0
      %1671 = vmatprep.subr.mxu0 0.0
      %1672 = vmatpush2.msra.mxu0 0.0
      %1673 = vmatprep.subr.mxu0 0.0
      %1674 = vmatpush2.msra.mxu0 0.0
      %1675 = vmatprep.subr.mxu0 0.0
      %1676 = vmatpush2.msra.mxu0 0.0
      %1677 = vmatprep.subr.mxu0 0.0
      %1678 = vmatpush2.msra.mxu0 0.0
      %1679 = vmatprep.subr.mxu0 0.0
      %1680 = vmatpush2.msra.mxu0 0.0
      %1681 = vmatprep.subr.mxu0 0.0
      %1682 = vmatpush2.msra.mxu0 0.0
      %1683 = vmatprep.subr.mxu0 0.0
      %1684 = vmatpush2.msra.mxu0 0.0
      %1685 = vmatprep.subr.mxu0 0.0
      %1686 = vmatpush2.msra.mxu0 0.0
      %1687 = vmatprep.subr.mxu0 0.0
      %1688 = vmatpush2.msra.mxu0 0.0
      %1689 = vmatprep.subr.mxu0 0.0
      %1690 = vmatpush2.msra.mxu0 0.0
      %1691 = vmatprep.subr.mxu0 0.0
      %1692 = vmatpush2.msra.mxu0 0.0
      %1693 = vmatprep.subr.mxu0 0.0
      %1694 = vmatpush2.msra.mxu0 0.0
      %1695 = vmatprep.subr.mxu0 0.0
      %1696 = vmatpush2.msra.mxu0 0.0
      %1697 = vmatprep.subr.mxu0 0.0
      %1698 = vmatpush2.msra.mxu0 0.0
      %1699 = vmatprep.subr.mxu0 0.0
      %1700 = vmatpush2.msra.mxu0 0.0
      %1701 = vmatprep.mubr.f32.mxu0 0.0
      %v1702 = vand.u32 %v1221, 4294901760
      %1703 = vmatmul.mubr.f32.gmra.mxu0 %v1702
      %v1704 = vpop.f32.mrf.mxu0
      %v1705 = vadd.f32 %v1630, %v1704
      %v1706 = vpop.f32.mrf.mxu0
      %1707 = vdwg.mxu0
      %v1708 = vadd.f32 %v1210, %v1705
      %s1709 = scalar_lea.vmem %s213, 24
      %v1710 = vld [vmem:[%s1709] sm:$0xff]
      %s1711 = scalar_lea.vmem %s1, 96
      %v1712 = vld [vmem:[%s1711] sm:$0xff]
      %v1713 = vld [vmem:[%s1711 + $0x8] sm:$0xff]
      %v1714 = vld [vmem:[%s1711 + $0x10] sm:$0xff]
      %v1715 = vld [vmem:[%s1711 + $0x18] sm:$0xff]
      %v1717 = vsel %vm236, %v1710, 0
      %1719 = vmatprep.subr.mxu0 0.0
      %1720 = vmatpush1.msra.mxu0 0.0
      %1721 = vmatprep.subr.mxu0 0.0
      %1722 = vmatpush1.msra.mxu0 0.0
      %1723 = vmatprep.subr.mxu0 0.0
      %1724 = vmatpush1.msra.mxu0 0.0
      %1725 = vmatprep.subr.mxu0 0.0
      %1726 = vmatpush1.msra.mxu0 0.0
      %1727 = vmatprep.subr.mxu0 0.0
      %1728 = vmatpush1.msra.mxu0 0.0
      %1729 = vmatprep.subr.mxu0 0.0
      %1730 = vmatpush1.msra.mxu0 0.0
      %1731 = vmatprep.subr.mxu0 0.0
      %1732 = vmatpush1.msra.mxu0 0.0
      %1733 = vmatprep.subr.mxu0 0.0
      %1734 = vmatpush1.msra.mxu0 0.0
      %1735 = vmatprep.subr.mxu0 0.0
      %1736 = vmatpush1.msra.mxu0 0.0
      %1737 = vmatprep.subr.mxu0 0.0
      %1738 = vmatpush1.msra.mxu0 0.0
      %1739 = vmatprep.subr.mxu0 0.0
      %1740 = vmatpush1.msra.mxu0 0.0
      %1741 = vmatprep.subr.mxu0 0.0
      %1742 = vmatpush1.msra.mxu0 0.0
      %1743 = vmatprep.subr.mxu0 0.0
      %v1744 = vand.u32 %v1715, 4294901760
      %1745 = vmatpush1.msra.mxu0 %v1744
      %1746 = vmatprep.subr.mxu0 0.0
      %v1747 = vand.u32 %v1714, 4294901760
      %1748 = vmatpush1.msra.mxu0 %v1747
      %1749 = vmatprep.subr.mxu0 0.0
      %v1750 = vand.u32 %v1713, 4294901760
      %1751 = vmatpush1.msra.mxu0 %v1750
      %1752 = vmatprep.subr.mxu0 0.0
      %v1753 = vand.u32 %v1712, 4294901760
      %1754 = vmatpush1.msra.mxu0 %v1753
      %1755 = vmatprep.subr.mxu0 0.0
      %1756 = vmatpush2.msra.mxu0 0.0
      %1757 = vmatprep.subr.mxu0 0.0
      %1758 = vmatpush2.msra.mxu0 0.0
      %1759 = vmatprep.subr.mxu0 0.0
      %1760 = vmatpush2.msra.mxu0 0.0
      %1761 = vmatprep.subr.mxu0 0.0
      %1762 = vmatpush2.msra.mxu0 0.0
      %1763 = vmatprep.subr.mxu0 0.0
      %1764 = vmatpush2.msra.mxu0 0.0
      %1765 = vmatprep.subr.mxu0 0.0
      %1766 = vmatpush2.msra.mxu0 0.0
      %1767 = vmatprep.subr.mxu0 0.0
      %1768 = vmatpush2.msra.mxu0 0.0
      %1769 = vmatprep.subr.mxu0 0.0
      %1770 = vmatpush2.msra.mxu0 0.0
      %1771 = vmatprep.subr.mxu0 0.0
      %1772 = vmatpush2.msra.mxu0 0.0
      %1773 = vmatprep.subr.mxu0 0.0
      %1774 = vmatpush2.msra.mxu0 0.0
      %1775 = vmatprep.subr.mxu0 0.0
      %1776 = vmatpush2.msra.mxu0 0.0
      %1777 = vmatprep.subr.mxu0 0.0
      %1778 = vmatpush2.msra.mxu0 0.0
      %1779 = vmatprep.subr.mxu0 0.0
      %1780 = vmatpush2.msra.mxu0 0.0
      %1781 = vmatprep.subr.mxu0 0.0
      %1782 = vmatpush2.msra.mxu0 0.0
      %1783 = vmatprep.subr.mxu0 0.0
      %1784 = vmatpush2.msra.mxu0 0.0
      %1785 = vmatprep.subr.mxu0 0.0
      %1786 = vmatpush2.msra.mxu0 0.0
      %1787 = vmatprep.mubr.f32.mxu0 0.0
      %v1788 = vand.u32 %v1717, 4294901760
      %v1789 = vsub.f32 %v1717, %v1788
      %v1790 = vand.u32 %v1789, 4294901760
      %v1791 = vsub.f32 %v1789, %v1790
      %v1792 = vand.u32 %v1791, 4294901760
      %1793 = vmatmul.mubr.f32.gmra.mxu0 %v1792
      %v1794 = vpop.f32.mrf.mxu0
      %v1795 = vadd.f32 0.0, %v1794
      %v1796 = vpop.f32.mrf.mxu0
      %1797 = vdwg.mxu0
      %1798 = vmatprep.subr.mxu0 0.0
      %1799 = vmatpush1.msra.mxu0 0.0
      %1800 = vmatprep.subr.mxu0 0.0
      %1801 = vmatpush1.msra.mxu0 0.0
      %1802 = vmatprep.subr.mxu0 0.0
      %1803 = vmatpush1.msra.mxu0 0.0
      %1804 = vmatprep.subr.mxu0 0.0
      %1805 = vmatpush1.msra.mxu0 0.0
      %1806 = vmatprep.subr.mxu0 0.0
      %1807 = vmatpush1.msra.mxu0 0.0
      %1808 = vmatprep.subr.mxu0 0.0
      %1809 = vmatpush1.msra.mxu0 0.0
      %1810 = vmatprep.subr.mxu0 0.0
      %1811 = vmatpush1.msra.mxu0 0.0
      %1812 = vmatprep.subr.mxu0 0.0
      %1813 = vmatpush1.msra.mxu0 0.0
      %1814 = vmatprep.subr.mxu0 0.0
      %1815 = vmatpush1.msra.mxu0 0.0
      %1816 = vmatprep.subr.mxu0 0.0
      %1817 = vmatpush1.msra.mxu0 0.0
      %1818 = vmatprep.subr.mxu0 0.0
      %1819 = vmatpush1.msra.mxu0 0.0
      %1820 = vmatprep.subr.mxu0 0.0
      %1821 = vmatpush1.msra.mxu0 0.0
      %1822 = vmatprep.subr.mxu0 0.0
      %v1823 = vand.u32 %v1715, 4294901760
      %v1824 = vsub.f32 %v1715, %v1823
      %v1825 = vand.u32 %v1824, 4294901760
      %v1826 = vsub.f32 %v1824, %v1825
      %v1827 = vand.u32 %v1826, 4294901760
      %1828 = vmatpush1.msra.mxu0 %v1827
      %1829 = vmatprep.subr.mxu0 0.0
      %v1830 = vand.u32 %v1714, 4294901760
      %v1831 = vsub.f32 %v1714, %v1830
      %v1832 = vand.u32 %v1831, 4294901760
      %v1833 = vsub.f32 %v1831, %v1832
      %v1834 = vand.u32 %v1833, 4294901760
      %1835 = vmatpush1.msra.mxu0 %v1834
      %1836 = vmatprep.subr.mxu0 0.0
      %v1837 = vand.u32 %v1713, 4294901760
      %v1838 = vsub.f32 %v1713, %v1837
      %v1839 = vand.u32 %v1838, 4294901760
      %v1840 = vsub.f32 %v1838, %v1839
      %v1841 = vand.u32 %v1840, 4294901760
      %1842 = vmatpush1.msra.mxu0 %v1841
      %1843 = vmatprep.subr.mxu0 0.0
      %v1844 = vand.u32 %v1712, 4294901760
      %v1845 = vsub.f32 %v1712, %v1844
      %v1846 = vand.u32 %v1845, 4294901760
      %v1847 = vsub.f32 %v1845, %v1846
      %v1848 = vand.u32 %v1847, 4294901760
      %1849 = vmatpush1.msra.mxu0 %v1848
      %1850 = vmatprep.subr.mxu0 0.0
      %1851 = vmatpush2.msra.mxu0 0.0
      %1852 = vmatprep.subr.mxu0 0.0
      %1853 = vmatpush2.msra.mxu0 0.0
      %1854 = vmatprep.subr.mxu0 0.0
      %1855 = vmatpush2.msra.mxu0 0.0
      %1856 = vmatprep.subr.mxu0 0.0
      %1857 = vmatpush2.msra.mxu0 0.0
      %1858 = vmatprep.subr.mxu0 0.0
      %1859 = vmatpush2.msra.mxu0 0.0
      %1860 = vmatprep.subr.mxu0 0.0
      %1861 = vmatpush2.msra.mxu0 0.0
      %1862 = vmatprep.subr.mxu0 0.0
      %1863 = vmatpush2.msra.mxu0 0.0
      %1864 = vmatprep.subr.mxu0 0.0
      %1865 = vmatpush2.msra.mxu0 0.0
      %1866 = vmatprep.subr.mxu0 0.0
      %1867 = vmatpush2.msra.mxu0 0.0
      %1868 = vmatprep.subr.mxu0 0.0
      %1869 = vmatpush2.msra.mxu0 0.0
      %1870 = vmatprep.subr.mxu0 0.0
      %1871 = vmatpush2.msra.mxu0 0.0
      %1872 = vmatprep.subr.mxu0 0.0
      %1873 = vmatpush2.msra.mxu0 0.0
      %1874 = vmatprep.subr.mxu0 0.0
      %1875 = vmatpush2.msra.mxu0 0.0
      %1876 = vmatprep.subr.mxu0 0.0
      %1877 = vmatpush2.msra.mxu0 0.0
      %1878 = vmatprep.subr.mxu0 0.0
      %1879 = vmatpush2.msra.mxu0 0.0
      %1880 = vmatprep.subr.mxu0 0.0
      %1881 = vmatpush2.msra.mxu0 0.0
      %1882 = vmatprep.mubr.f32.mxu0 0.0
      %v1883 = vand.u32 %v1717, 4294901760
      %1884 = vmatmul.mubr.f32.gmra.mxu0 %v1883
      %v1885 = vpop.f32.mrf.mxu0
      %v1886 = vadd.f32 %v1795, %v1885
      %v1887 = vpop.f32.mrf.mxu0
      %1888 = vdwg.mxu0
      %1889 = vmatprep.subr.mxu0 0.0
      %1890 = vmatpush1.msra.mxu0 0.0
      %1891 = vmatprep.subr.mxu0 0.0
      %1892 = vmatpush1.msra.mxu0 0.0
      %1893 = vmatprep.subr.mxu0 0.0
      %1894 = vmatpush1.msra.mxu0 0.0
      %1895 = vmatprep.subr.mxu0 0.0
      %1896 = vmatpush1.msra.mxu0 0.0
      %1897 = vmatprep.subr.mxu0 0.0
      %1898 = vmatpush1.msra.mxu0 0.0
      %1899 = vmatprep.subr.mxu0 0.0
      %1900 = vmatpush1.msra.mxu0 0.0
      %1901 = vmatprep.subr.mxu0 0.0
      %1902 = vmatpush1.msra.mxu0 0.0
      %1903 = vmatprep.subr.mxu0 0.0
      %1904 = vmatpush1.msra.mxu0 0.0
      %1905 = vmatprep.subr.mxu0 0.0
      %1906 = vmatpush1.msra.mxu0 0.0
      %1907 = vmatprep.subr.mxu0 0.0
      %1908 = vmatpush1.msra.mxu0 0.0
      %1909 = vmatprep.subr.mxu0 0.0
      %1910 = vmatpush1.msra.mxu0 0.0
      %1911 = vmatprep.subr.mxu0 0.0
      %1912 = vmatpush1.msra.mxu0 0.0
      %1913 = vmatprep.subr.mxu0 0.0
      %v1914 = vand.u32 %v1715, 4294901760
      %v1915 = vsub.f32 %v1715, %v1914
      %1916 = vmatpush1.msra.mxu0 %v1915
      %1917 = vmatprep.subr.mxu0 0.0
      %v1918 = vand.u32 %v1714, 4294901760
      %v1919 = vsub.f32 %v1714, %v1918
      %1920 = vmatpush1.msra.mxu0 %v1919
      %1921 = vmatprep.subr.mxu0 0.0
      %v1922 = vand.u32 %v1713, 4294901760
      %v1923 = vsub.f32 %v1713, %v1922
      %1924 = vmatpush1.msra.mxu0 %v1923
      %1925 = vmatprep.subr.mxu0 0.0
      %v1926 = vand.u32 %v1712, 4294901760
      %v1927 = vsub.f32 %v1712, %v1926
      %1928 = vmatpush1.msra.mxu0 %v1927
      %1929 = vmatprep.subr.mxu0 0.0
      %1930 = vmatpush2.msra.mxu0 0.0
      %1931 = vmatprep.subr.mxu0 0.0
      %1932 = vmatpush2.msra.mxu0 0.0
      %1933 = vmatprep.subr.mxu0 0.0
      %1934 = vmatpush2.msra.mxu0 0.0
      %1935 = vmatprep.subr.mxu0 0.0
      %1936 = vmatpush2.msra.mxu0 0.0
      %1937 = vmatprep.subr.mxu0 0.0
      %1938 = vmatpush2.msra.mxu0 0.0
      %1939 = vmatprep.subr.mxu0 0.0
      %1940 = vmatpush2.msra.mxu0 0.0
      %1941 = vmatprep.subr.mxu0 0.0
      %1942 = vmatpush2.msra.mxu0 0.0
      %1943 = vmatprep.subr.mxu0 0.0
      %1944 = vmatpush2.msra.mxu0 0.0
      %1945 = vmatprep.subr.mxu0 0.0
      %1946 = vmatpush2.msra.mxu0 0.0
      %1947 = vmatprep.subr.mxu0 0.0
      %1948 = vmatpush2.msra.mxu0 0.0
      %1949 = vmatprep.subr.mxu0 0.0
      %1950 = vmatpush2.msra.mxu0 0.0
      %1951 = vmatprep.subr.mxu0 0.0
      %1952 = vmatpush2.msra.mxu0 0.0
      %1953 = vmatprep.subr.mxu0 0.0
      %1954 = vmatpush2.msra.mxu0 0.0
      %1955 = vmatprep.subr.mxu0 0.0
      %1956 = vmatpush2.msra.mxu0 0.0
      %1957 = vmatprep.subr.mxu0 0.0
      %1958 = vmatpush2.msra.mxu0 0.0
      %1959 = vmatprep.subr.mxu0 0.0
      %1960 = vmatpush2.msra.mxu0 0.0
      %1961 = vmatprep.mubr.f32.mxu0 0.0
      %v1962 = vand.u32 %v1717, 4294901760
      %v1963 = vsub.f32 %v1717, %v1962
      %1964 = vmatmul.mubr.f32.gmra.mxu0 %v1963
      %v1965 = vpop.f32.mrf.mxu0
      %v1966 = vadd.f32 %v1886, %v1965
      %v1967 = vpop.f32.mrf.mxu0
      %1968 = vdwg.mxu0
      %1969 = vmatprep.subr.mxu0 0.0
      %1970 = vmatpush1.msra.mxu0 0.0
      %1971 = vmatprep.subr.mxu0 0.0
      %1972 = vmatpush1.msra.mxu0 0.0
      %1973 = vmatprep.subr.mxu0 0.0
      %1974 = vmatpush1.msra.mxu0 0.0
      %1975 = vmatprep.subr.mxu0 0.0
      %1976 = vmatpush1.msra.mxu0 0.0
      %1977 = vmatprep.subr.mxu0 0.0
      %1978 = vmatpush1.msra.mxu0 0.0
      %1979 = vmatprep.subr.mxu0 0.0
      %1980 = vmatpush1.msra.mxu0 0.0
      %1981 = vmatprep.subr.mxu0 0.0
      %1982 = vmatpush1.msra.mxu0 0.0
      %1983 = vmatprep.subr.mxu0 0.0
      %1984 = vmatpush1.msra.mxu0 0.0
      %1985 = vmatprep.subr.mxu0 0.0
      %1986 = vmatpush1.msra.mxu0 0.0
      %1987 = vmatprep.subr.mxu0 0.0
      %1988 = vmatpush1.msra.mxu0 0.0
      %1989 = vmatprep.subr.mxu0 0.0
      %1990 = vmatpush1.msra.mxu0 0.0
      %1991 = vmatprep.subr.mxu0 0.0
      %1992 = vmatpush1.msra.mxu0 0.0
      %1993 = vmatprep.subr.mxu0 0.0
      %v1994 = vand.u32 %v1715, 4294901760
      %1995 = vmatpush1.msra.mxu0 %v1994
      %1996 = vmatprep.subr.mxu0 0.0
      %v1997 = vand.u32 %v1714, 4294901760
      %1998 = vmatpush1.msra.mxu0 %v1997
      %1999 = vmatprep.subr.mxu0 0.0
      %v2000 = vand.u32 %v1713, 4294901760
      %2001 = vmatpush1.msra.mxu0 %v2000
      %2002 = vmatprep.subr.mxu0 0.0
      %v2003 = vand.u32 %v1712, 4294901760
      %2004 = vmatpush1.msra.mxu0 %v2003
      %2005 = vmatprep.subr.mxu0 0.0
      %2006 = vmatpush2.msra.mxu0 0.0
      %2007 = vmatprep.subr.mxu0 0.0
      %2008 = vmatpush2.msra.mxu0 0.0
      %2009 = vmatprep.subr.mxu0 0.0
      %2010 = vmatpush2.msra.mxu0 0.0
      %2011 = vmatprep.subr.mxu0 0.0
      %2012 = vmatpush2.msra.mxu0 0.0
      %2013 = vmatprep.subr.mxu0 0.0
      %2014 = vmatpush2.msra.mxu0 0.0
      %2015 = vmatprep.subr.mxu0 0.0
      %2016 = vmatpush2.msra.mxu0 0.0
      %2017 = vmatprep.subr.mxu0 0.0
      %2018 = vmatpush2.msra.mxu0 0.0
      %2019 = vmatprep.subr.mxu0 0.0
      %2020 = vmatpush2.msra.mxu0 0.0
      %2021 = vmatprep.subr.mxu0 0.0
      %2022 = vmatpush2.msra.mxu0 0.0
      %2023 = vmatprep.subr.mxu0 0.0
      %2024 = vmatpush2.msra.mxu0 0.0
      %2025 = vmatprep.subr.mxu0 0.0
      %2026 = vmatpush2.msra.mxu0 0.0
      %2027 = vmatprep.subr.mxu0 0.0
      %2028 = vmatpush2.msra.mxu0 0.0
      %2029 = vmatprep.subr.mxu0 0.0
      %2030 = vmatpush2.msra.mxu0 0.0
      %2031 = vmatprep.subr.mxu0 0.0
      %2032 = vmatpush2.msra.mxu0 0.0
      %2033 = vmatprep.subr.mxu0 0.0
      %2034 = vmatpush2.msra.mxu0 0.0
      %2035 = vmatprep.subr.mxu0 0.0
      %2036 = vmatpush2.msra.mxu0 0.0
      %2037 = vmatprep.mubr.f32.mxu0 0.0
      %v2038 = vand.u32 %v1717, 4294901760
      %v2039 = vsub.f32 %v1717, %v2038
      %v2040 = vand.u32 %v2039, 4294901760
      %2041 = vmatmul.mubr.f32.gmra.mxu0 %v2040
      %v2042 = vpop.f32.mrf.mxu0
      %v2043 = vadd.f32 %v1966, %v2042
      %v2044 = vpop.f32.mrf.mxu0
      %2045 = vdwg.mxu0
      %2046 = vmatprep.subr.mxu0 0.0
      %2047 = vmatpush1.msra.mxu0 0.0
      %2048 = vmatprep.subr.mxu0 0.0
      %2049 = vmatpush1.msra.mxu0 0.0
      %2050 = vmatprep.subr.mxu0 0.0
      %2051 = vmatpush1.msra.mxu0 0.0
      %2052 = vmatprep.subr.mxu0 0.0
      %2053 = vmatpush1.msra.mxu0 0.0
      %2054 = vmatprep.subr.mxu0 0.0
      %2055 = vmatpush1.msra.mxu0 0.0
      %2056 = vmatprep.subr.mxu0 0.0
      %2057 = vmatpush1.msra.mxu0 0.0
      %2058 = vmatprep.subr.mxu0 0.0
      %2059 = vmatpush1.msra.mxu0 0.0
      %2060 = vmatprep.subr.mxu0 0.0
      %2061 = vmatpush1.msra.mxu0 0.0
      %2062 = vmatprep.subr.mxu0 0.0
      %2063 = vmatpush1.msra.mxu0 0.0
      %2064 = vmatprep.subr.mxu0 0.0
      %2065 = vmatpush1.msra.mxu0 0.0
      %2066 = vmatprep.subr.mxu0 0.0
      %2067 = vmatpush1.msra.mxu0 0.0
      %2068 = vmatprep.subr.mxu0 0.0
      %2069 = vmatpush1.msra.mxu0 0.0
      %2070 = vmatprep.subr.mxu0 0.0
      %v2071 = vand.u32 %v1715, 4294901760
      %v2072 = vsub.f32 %v1715, %v2071
      %v2073 = vand.u32 %v2072, 4294901760
      %2074 = vmatpush1.msra.mxu0 %v2073
      %2075 = vmatprep.subr.mxu0 0.0
      %v2076 = vand.u32 %v1714, 4294901760
      %v2077 = vsub.f32 %v1714, %v2076
      %v2078 = vand.u32 %v2077, 4294901760
      %2079 = vmatpush1.msra.mxu0 %v2078
      %2080 = vmatprep.subr.mxu0 0.0
      %v2081 = vand.u32 %v1713, 4294901760
      %v2082 = vsub.f32 %v1713, %v2081
      %v2083 = vand.u32 %v2082, 4294901760
      %2084 = vmatpush1.msra.mxu0 %v2083
      %2085 = vmatprep.subr.mxu0 0.0
      %v2086 = vand.u32 %v1712, 4294901760
      %v2087 = vsub.f32 %v1712, %v2086
      %v2088 = vand.u32 %v2087, 4294901760
      %2089 = vmatpush1.msra.mxu0 %v2088
      %2090 = vmatprep.subr.mxu0 0.0
      %2091 = vmatpush2.msra.mxu0 0.0
      %2092 = vmatprep.subr.mxu0 0.0
      %2093 = vmatpush2.msra.mxu0 0.0
      %2094 = vmatprep.subr.mxu0 0.0
      %2095 = vmatpush2.msra.mxu0 0.0
      %2096 = vmatprep.subr.mxu0 0.0
      %2097 = vmatpush2.msra.mxu0 0.0
      %2098 = vmatprep.subr.mxu0 0.0
      %2099 = vmatpush2.msra.mxu0 0.0
      %2100 = vmatprep.subr.mxu0 0.0
      %2101 = vmatpush2.msra.mxu0 0.0
      %2102 = vmatprep.subr.mxu0 0.0
      %2103 = vmatpush2.msra.mxu0 0.0
      %2104 = vmatprep.subr.mxu0 0.0
      %2105 = vmatpush2.msra.mxu0 0.0
      %2106 = vmatprep.subr.mxu0 0.0
      %2107 = vmatpush2.msra.mxu0 0.0
      %2108 = vmatprep.subr.mxu0 0.0
      %2109 = vmatpush2.msra.mxu0 0.0
      %2110 = vmatprep.subr.mxu0 0.0
      %2111 = vmatpush2.msra.mxu0 0.0
      %2112 = vmatprep.subr.mxu0 0.0
      %2113 = vmatpush2.msra.mxu0 0.0
      %2114 = vmatprep.subr.mxu0 0.0
      %2115 = vmatpush2.msra.mxu0 0.0
      %2116 = vmatprep.subr.mxu0 0.0
      %2117 = vmatpush2.msra.mxu0 0.0
      %2118 = vmatprep.subr.mxu0 0.0
      %2119 = vmatpush2.msra.mxu0 0.0
      %2120 = vmatprep.subr.mxu0 0.0
      %2121 = vmatpush2.msra.mxu0 0.0
      %2122 = vmatprep.mubr.f32.mxu0 0.0
      %v2123 = vand.u32 %v1717, 4294901760
      %2124 = vmatmul.mubr.f32.gmra.mxu0 %v2123
      %v2125 = vpop.f32.mrf.mxu0
      %v2126 = vadd.f32 %v2043, %v2125
      %v2127 = vpop.f32.mrf.mxu0
      %2128 = vdwg.mxu0
      %2129 = vmatprep.subr.mxu0 0.0
      %2130 = vmatpush1.msra.mxu0 0.0
      %2131 = vmatprep.subr.mxu0 0.0
      %2132 = vmatpush1.msra.mxu0 0.0
      %2133 = vmatprep.subr.mxu0 0.0
      %2134 = vmatpush1.msra.mxu0 0.0
      %2135 = vmatprep.subr.mxu0 0.0
      %2136 = vmatpush1.msra.mxu0 0.0
      %2137 = vmatprep.subr.mxu0 0.0
      %2138 = vmatpush1.msra.mxu0 0.0
      %2139 = vmatprep.subr.mxu0 0.0
      %2140 = vmatpush1.msra.mxu0 0.0
      %2141 = vmatprep.subr.mxu0 0.0
      %2142 = vmatpush1.msra.mxu0 0.0
      %2143 = vmatprep.subr.mxu0 0.0
      %2144 = vmatpush1.msra.mxu0 0.0
      %2145 = vmatprep.subr.mxu0 0.0
      %2146 = vmatpush1.msra.mxu0 0.0
      %2147 = vmatprep.subr.mxu0 0.0
      %2148 = vmatpush1.msra.mxu0 0.0
      %2149 = vmatprep.subr.mxu0 0.0
      %2150 = vmatpush1.msra.mxu0 0.0
      %2151 = vmatprep.subr.mxu0 0.0
      %2152 = vmatpush1.msra.mxu0 0.0
      %2153 = vmatprep.subr.mxu0 0.0
      %v2154 = vand.u32 %v1715, 4294901760
      %2155 = vmatpush1.msra.mxu0 %v2154
      %2156 = vmatprep.subr.mxu0 0.0
      %v2157 = vand.u32 %v1714, 4294901760
      %2158 = vmatpush1.msra.mxu0 %v2157
      %2159 = vmatprep.subr.mxu0 0.0
      %v2160 = vand.u32 %v1713, 4294901760
      %2161 = vmatpush1.msra.mxu0 %v2160
      %2162 = vmatprep.subr.mxu0 0.0
      %v2163 = vand.u32 %v1712, 4294901760
      %2164 = vmatpush1.msra.mxu0 %v2163
      %2165 = vmatprep.subr.mxu0 0.0
      %2166 = vmatpush2.msra.mxu0 0.0
      %2167 = vmatprep.subr.mxu0 0.0
      %2168 = vmatpush2.msra.mxu0 0.0
      %2169 = vmatprep.subr.mxu0 0.0
      %2170 = vmatpush2.msra.mxu0 0.0
      %2171 = vmatprep.subr.mxu0 0.0
      %2172 = vmatpush2.msra.mxu0 0.0
      %2173 = vmatprep.subr.mxu0 0.0
      %2174 = vmatpush2.msra.mxu0 0.0
      %2175 = vmatprep.subr.mxu0 0.0
      %2176 = vmatpush2.msra.mxu0 0.0
      %2177 = vmatprep.subr.mxu0 0.0
      %2178 = vmatpush2.msra.mxu0 0.0
      %2179 = vmatprep.subr.mxu0 0.0
      %2180 = vmatpush2.msra.mxu0 0.0
      %2181 = vmatprep.subr.mxu0 0.0
      %2182 = vmatpush2.msra.mxu0 0.0
      %2183 = vmatprep.subr.mxu0 0.0
      %2184 = vmatpush2.msra.mxu0 0.0
      %2185 = vmatprep.subr.mxu0 0.0
      %2186 = vmatpush2.msra.mxu0 0.0
      %2187 = vmatprep.subr.mxu0 0.0
      %2188 = vmatpush2.msra.mxu0 0.0
      %2189 = vmatprep.subr.mxu0 0.0
      %2190 = vmatpush2.msra.mxu0 0.0
      %2191 = vmatprep.subr.mxu0 0.0
      %2192 = vmatpush2.msra.mxu0 0.0
      %2193 = vmatprep.subr.mxu0 0.0
      %2194 = vmatpush2.msra.mxu0 0.0
      %2195 = vmatprep.subr.mxu0 0.0
      %2196 = vmatpush2.msra.mxu0 0.0
      %2197 = vmatprep.mubr.f32.mxu0 0.0
      %v2198 = vand.u32 %v1717, 4294901760
      %2199 = vmatmul.mubr.f32.gmra.mxu0 %v2198
      %v2200 = vpop.f32.mrf.mxu0
      %v2201 = vadd.f32 %v2126, %v2200
      %v2202 = vpop.f32.mrf.mxu0
      %2203 = vdwg.mxu0
      %v2204 = vadd.f32 %v1708, %v2201
      %v2205 = vld [vmem:[%s216] sm:$0x1]
      %v2207 = vlaneseq
      %v2208 = vshrl.u32 %v2207, 7
      %v2209 = vsub.s32 0, %v2208
      %v2210 = vrot.slane %v2205, %v2209
      %2211 = vset.pattern.permute.xlu0 0
      %2212 = vperm.xlu0 %2211, %v2210
      %v2213 = vpop.permute.xlu0 %2212
      %v2215 = vmul.f32 %v2204, %v2213
      %v2216 = vld [vmem:[%s219] sm:$0x1]
      %v2218 = vlaneseq
      %v2219 = vshrl.u32 %v2218, 7
      %v2220 = vsub.s32 0, %v2219
      %v2221 = vrot.slane %v2216, %v2220
      %2222 = vset.pattern.permute.xlu0 0
      %2223 = vperm.xlu0 %2222, %v2221
      %v2224 = vpop.permute.xlu0 %2223
      %v2226 = vadd.f32 %v2215, %v2224
      %v2227 = vmax.f32 %v2226, 0.0
      %2228 = vst [vmem:[%s223] sm:$0xff] %v2227
      %p2229 = scmp.lt.s32.totalorder %s15, 3
      %s2230 = scalar_select %p2229, %s15, 3
      %s2231 = smul.addr %s2230, 8
      %s2232 = scalar_lea.vmem %s4, %s2231
      // Predicated region
      $region37: #{wavelet_unpool.3} parent=35 // pred_check
        %p2233 = pneg %p132
      $region38: #{wavelet_unpool.3} parent=35 // pred_check_branch
        %2235 = sbr.rel (%p2233) target = $region40
      $region39: #{wavelet_unpool.3} parent=35 // pred_region
        _
      $region40: #{wavelet_unpool.3} parent=35 // pred_fallthru
        _
    $region36: #{wavelet_unpool.3} parent=5 // pred_fallthru
      _
    %p2236 = scmp.le.s32.totalorder 2, %s10
    // Predicated region
    $region41: #{wavelet_unpool.3} parent=5 // pred_check
      %p2237 = pneg %p2236
    $region42: #{wavelet_unpool.3} parent=5 // pred_check_branch
      %2239 = sbr.rel (%p2237) target = $region44
    $region43: #{wavelet_unpool.3} parent=5 // pred_region
      %s2240 = ssub.s32 %s10, 2
      // Predicated region
      $region45: #{wavelet_unpool.3} parent=43 // pred_check
        %p2241 = pneg %p138
      $region46: #{wavelet_unpool.3} parent=43 // pred_check_branch
        %2243 = sbr.rel (%p2241) target = $region48
      $region47: #{wavelet_unpool.3} parent=43 // pred_region
        %p2244 = scmp.lt.s32.totalorder %s16, 3
        %s2245 = scalar_select %p2244, %s16, 3
        %s2246 = smul.addr %s2245, 8
        %s2247 = scalar_lea.vmem %s4, %s2246
      $region48: #{wavelet_unpool.3} parent=43 // pred_fallthru
        _
    $region44: #{wavelet_unpool.3} parent=5 // pred_fallthru
      _
  $region6: #{wavelet_unpool.3} parent=0 // loop_footer
    %s14 = sadd.s32 1, %s10
  $region7: #{wavelet_unpool.3} parent=0 // loop_footer_branch
    %9 = sbr.rel target = $region3
  $region8: #{wavelet_unpool.3} parent=0 // loop_exit
    _

</llo_original>
